<compile_context>
chip_gen: v7x
topology: tpu7x:2x2x1
jax: 0.10.0
libtpu: 0.0.40
codegen_flags: <defaults>
</compile_context>

<pallas_src>
import numpy as np
import jax
import jax.numpy as jnp
from jax.experimental import pallas as pl
from jax.experimental.pallas import tpu as pltpu


_VMEM = pl.BlockSpec(memory_space=pltpu.MemorySpace.VMEM)


# ----------------------------------------------------------------------------
# Host-side input prep (plain JAX / numpy, O(B) real data, no O(B^2) constants)
# ----------------------------------------------------------------------------
def _conv2_tap_mask(batch):
    """(1, 9*B*49) 0/1 mask: zero where a conv2 tap falls in conv2's zero pad."""
    m = np.zeros((3, 3, 7, 7), np.float32)
    for ki in range(3):
        for kj in range(3):
            for ho in range(7):
                for wo in range(7):
                    hi, wi = 2 * ho + ki - 1, 2 * wo + kj - 1
                    if 0 <= hi < 14 and 0 <= wi < 14:
                        m[ki, kj, ho, wo] = 1.0
    m = m.reshape(9, 1, 49)
    m = np.broadcast_to(m, (9, batch, 49)).reshape(1, 9 * batch * 49)
    return np.ascontiguousarray(m)


def _conv1_patches_expanded(x_nchw):
    """(10, 9*B*49): rows 0..8 = conv1 3x3 patch values (tap t1) evaluated at
    the conv1-output position that conv2 tap t2 needs for conv2-output pixel
    q2; row 9 = the conv2-padding mask.  Columns ordered (t2, b, q2=ho*7+wo).
    This lets the kernel form conv2's K=72 im2col patches with slices only."""
    b = x_nchw.shape[0]
    x2d = x_nchw[:, 0]                                    # (B, 28, 28), cin=1
    xp = jnp.pad(x2d, ((0, 0), (1, 1), (1, 1)))           # conv1 zero padding
    # conv1 patches at every conv1-output position (14x14):
    p1 = jnp.stack([xp[:, ki:ki + 28:2, kj:kj + 28:2]     # (B, 14, 14)
                    for ki in range(3) for kj in range(3)], axis=0)
    p1p = jnp.pad(p1, ((0, 0), (0, 0), (1, 1), (1, 1)))   # conv2 zero padding
    cols = [p1p[:, :, ki:ki + 14:2, kj:kj + 14:2].reshape(9, b * 49)
            for ki in range(3) for kj in range(3)]
    p1e = jnp.concatenate(cols, axis=1)                   # (9, 9*B*49)
    mask = jnp.asarray(_conv2_tap_mask(b))                # (1, 9*B*49)
    return jnp.concatenate([p1e, mask], axis=0)           # (10, 9*B*49)


def _conv3_gather_op():
    """(49, 81) batch-independent one-hot: column (t3*9 + q3) selects the 7x7
    conv2-output pixel that conv3 tap t3 needs for conv3-output pixel q3."""
    op = np.zeros((49, 81), np.float32)
    for ki in range(3):
        for kj in range(3):
            t = ki * 3 + kj
            for ho in range(3):
                for wo in range(3):
                    hi, wi = 2 * ho + ki, 2 * wo + kj     # stride 2, pad 0
                    op[hi * 7 + wi, t * 9 + ho * 3 + wo] = 1.0
    return op


# ----------------------------------------------------------------------------
# Parameters (torch-conventional layouts) and trace-time packing
# ----------------------------------------------------------------------------
def init_params(key, latent_dims):
    ks = jax.random.split(key, 12)

    def w(k, shape, fan_in):
        return jax.random.normal(k, shape, jnp.float32) / np.sqrt(fan_in)

    def b(k, n):
        return 0.01 * jax.random.normal(k, (n,), jnp.float32)

    return {
        "conv1_w": w(ks[0], (8, 1, 3, 3), 9),    "conv1_b": b(ks[1], 8),
        "conv2_w": w(ks[2], (16, 8, 3, 3), 72),  "conv2_b": b(ks[3], 16),
        "bn_gamma": jnp.ones((16,), jnp.float32),        # fresh BatchNorm2d(16)
        "bn_beta": jnp.zeros((16,), jnp.float32),
        "conv3_w": w(ks[4], (32, 16, 3, 3), 144), "conv3_b": b(ks[5], 32),
        "lin1_w": w(ks[6], (128, 288), 288),     "lin1_b": b(ks[7], 128),
        "lin2_w": w(ks[8], (latent_dims, 128), 128),
        "lin2_b": b(ks[9], latent_dims),
        "lin3_w": w(ks[10], (latent_dims, 128), 128),
        "lin3_b": b(ks[11], latent_dims),
    }


def _pack_params(p, latent):
    """One (184+2L, 288) weight pack and one (216+2L, 1) bias pack.

    Column orderings are folded in here (trace time, free):
      conv2/conv3 weights -> (cout, tap*cin + cin) to match slice-built patches,
      linear1 columns reordered from torch-flatten (c,hw) to our (hw,c) order,
      mu / log-sigma heads fused into one (2L, 128) block."""
    wc1 = p["conv1_w"].reshape(8, 9)
    w2 = jnp.transpose(p["conv2_w"], (0, 2, 3, 1)).reshape(16, 72)
    w3 = jnp.transpose(p["conv3_w"], (0, 2, 3, 1)).reshape(32, 144)
    wh = jnp.concatenate([p["lin2_w"], p["lin3_w"]], axis=0)      # (2L, 128)
    w1 = p["lin1_w"].reshape(128, 32, 9).transpose(0, 2, 1).reshape(128, 288)

    def padw(a):
        return jnp.pad(a, ((0, 0), (0, 288 - a.shape[1])))

    wpack = jnp.concatenate([padw(wc1), padw(w2), padw(w3), padw(wh), w1],
                            axis=0)                               # (184+2L, 288)
    bpack = jnp.concatenate(
        [p["conv1_b"], p["conv2_b"], p["bn_gamma"], p["bn_beta"],
         p["conv3_b"], p["lin1_b"], p["lin2_b"], p["lin3_b"]])[:, None]
    return wpack, bpack


# ----------------------------------------------------------------------------
# The fused kernel (factory closes over static batch / latent sizes)
# ----------------------------------------------------------------------------
def _make_encoder_kernel(batch, latent):
    f32 = jnp.float32
    B, L = batch, latent
    n2 = B * 49                                    # total conv2 output pixels
    # weight-pack row offsets
    WC1, WC2, WC3, WHD = 0, 8, 24, 56
    WL1 = 56 + 2 * L
    # bias-pack row offsets
    BC1, BC2, BNG, BNB, BC3, BL1, BHD = 0, 8, 24, 40, 56, 88, 216

    def kernel(pm_ref, s3_ref, w_ref, b_ref, noise_ref, out_ref):
        # ---- unpack params (static slices, stays in vregs) ------------------
        wc1 = w_ref[WC1:WC1 + 8, 0:9]
        w2 = w_ref[WC2:WC2 + 16, 0:72]
        w3 = w_ref[WC3:WC3 + 32, 0:144]
        wh = w_ref[WHD:WHD + 2 * L, 0:128]
        w1 = w_ref[WL1:WL1 + 128, 0:288]
        bc1 = b_ref[BC1:BC1 + 8, :]
        bc2 = b_ref[BC2:BC2 + 16, :]
        bng = b_ref[BNG:BNG + 16, :]
        bnb = b_ref[BNB:BNB + 16, :]
        bc3 = b_ref[BC3:BC3 + 32, :]
        bl1 = b_ref[BL1:BL1 + 128, :]
        bhd = b_ref[BHD:BHD + 2 * L, :]

        # ---- conv1 (1->8, k3 s2 p1, ReLU) evaluated directly at the
        #      9*B*49 input positions conv2 needs; mask zeroes conv2's padding -
        p1e = pm_ref[0:9, :]                                   # (9, 9*B*49)
        mask = pm_ref[9:10, :]                                 # (1, 9*B*49)
        y1e = jnp.dot(wc1, p1e, preferred_element_type=f32)    # (8, 9*B*49)
        y1e = jnp.maximum(y1e + bc1, 0.0) * mask

        # ---- conv2 (8->16, k3 s2 p1): one K=72 dot over (tap, cin) ----------
        p2 = jnp.concatenate(
            [y1e[:, t * n2:(t + 1) * n2] for t in range(9)], axis=0)  # (72, B*49)
        y2 = jnp.dot(w2, p2, preferred_element_type=f32) + bc2        # (16, B*49)

        # ---- BatchNorm2d, training-mode batch stats (biased var, eps=1e-5) --
        inv_n = 1.0 / float(n2)
        mean = jnp.sum(y2, axis=1, keepdims=True) * inv_n
        ex2 = jnp.sum(y2 * y2, axis=1, keepdims=True) * inv_n
        var = jnp.maximum(ex2 - mean * mean, 0.0)
        y2 = (y2 - mean) * jax.lax.rsqrt(var + 1e-5)
        y2 = jnp.maximum(y2 * bng + bnb, 0.0)

        # ---- conv3 (16->32, k3 s2 p0): per-sample batch-independent gather,
        #      then one K=144 dot ---------------------------------------------
        p3_blocks = []
        for b in range(B):
            g = jnp.dot(y2[:, b * 49:(b + 1) * 49], s3_ref[...],
                        preferred_element_type=f32)            # (16, 81)
            p3_blocks.append(
                jnp.concatenate([g[:, t * 9:(t + 1) * 9] for t in range(9)],
                                axis=0))                       # (144, 9)
        p3 = jnp.concatenate(p3_blocks, axis=1)                # (144, B*9)
        y3 = jnp.maximum(jnp.dot(w3, p3, preferred_element_type=f32) + bc3,
                         0.0)                                  # (32, B*9)

        # ---- flatten (slices + concat; torch (c,hw) order folded into w1)
        #      + linear1 (K=288) + ReLU ---------------------------------------
        feat = jnp.concatenate(
            [jnp.concatenate(
                [y3[:, b * 9 + p:b * 9 + p + 1] for p in range(9)], axis=0)
             for b in range(B)], axis=1)                       # (288, B)
        h = jnp.maximum(jnp.dot(w1, feat, preferred_element_type=f32) + bl1,
                        0.0)                                   # (128, B)

        # ---- fused mu / log-sigma heads, reparameterized sample, KL ---------
        o = jnp.dot(wh, h, preferred_element_type=f32) + bhd   # (2L, B)
        mu = o[:L, :]
        log_sigma = o[L:2 * L, :]
        sigma = jnp.exp(log_sigma)
        z = mu + sigma * noise_ref[...]
        kl = jnp.sum(jnp.sum(sigma * sigma + mu * mu - log_sigma - 0.5,
                             axis=1, keepdims=True), axis=0, keepdims=True)
        out_ref[...] = jnp.concatenate(
            [z, jnp.broadcast_to(kl, (1, B))], axis=0)         # (L+1, B)

    return kernel


# ----------------------------------------------------------------------------
# Forward pass: one fused pallas_call
# ----------------------------------------------------------------------------
def variational_encoder_forward(params, x_nchw, noise):
    b = x_nchw.shape[0]
    latent = noise.shape[1]

    pm = _conv1_patches_expanded(x_nchw)            # (10, 9*B*49), real data
    s3 = jnp.asarray(_conv3_gather_op())            # (49, 81), batch-indep.
    wpack, bpack = _pack_params(params, latent)

    kernel = _make_encoder_kernel(b, latent)
    out = pl.pallas_call(
        kernel,
        out_shape=jax.ShapeDtypeStruct((latent + 1, b), jnp.float32),
        in_specs=[_VMEM] * 5,
        out_specs=_VMEM,
    )(pm, s3, wpack, bpack, noise.T)

    z = out[:latent, :].T                           # (B, L)
    kl = out[latent, 0]
    # TODO(synk): BatchNorm running_mean/running_var updates (training-side
    # module state) are not emitted; only the forward normalization matches.
    return z, kl


# ----------------------------------------------------------------------------
# Pure-JAX reference (float32, HIGHEST precision) for a correctness check
# ----------------------------------------------------------------------------
def _reference_forward(params, x, noise):
    hi = jax.lax.Precision.HIGHEST

    def conv(y, w, bias, stride, pad):
        y = jax.lax.conv_general_dilated(
            y, w, (stride, stride), [(pad, pad), (pad, pad)],
            dimension_numbers=("NCHW", "OIHW", "NCHW"), precision=hi)
        return y + bias[None, :, None, None]

    y = jax.nn.relu(conv(x, params["conv1_w"], params["conv1_b"], 2, 1))
    y = conv(y, params["conv2_w"], params["conv2_b"], 2, 1)
    mean = y.mean(axis=(0, 2, 3), keepdims=True)
    var = y.var(axis=(0, 2, 3), keepdims=True)               # biased
    y = (y - mean) * jax.lax.rsqrt(var + 1e-5)
    y = y * params["bn_gamma"][None, :, None, None] \
        + params["bn_beta"][None, :, None, None]
    y = jax.nn.relu(y)
    y = jax.nn.relu(conv(y, params["conv3_w"], params["conv3_b"], 2, 0))
    f = y.reshape(y.shape[0], -1)                            # (B, 288) (c,h,w)
    h = jax.nn.relu(jnp.dot(f, params["lin1_w"].T, precision=hi)
                    + params["lin1_b"])
    mu = jnp.dot(h, params["lin2_w"].T, precision=hi) + params["lin2_b"]
    log_sigma = jnp.dot(h, params["lin3_w"].T, precision=hi) + params["lin3_b"]
    sigma = jnp.exp(log_sigma)
    z = mu + sigma * noise
    kl = jnp.sum(sigma ** 2 + mu ** 2 - log_sigma - 0.5)
    return z, kl


if __name__ == "__main__":
    LATENT_DIMS = 8
    BATCH = 2

    root = jax.random.PRNGKey(0)
    k_params, k_x, k_noise = jax.random.split(root, 3)

    params = init_params(k_params, LATENT_DIMS)
    x = jax.random.normal(k_x, (BATCH, 1, 28, 28), jnp.float32)   # NCHW input
    noise = jax.random.normal(k_noise, (BATCH, LATENT_DIMS), jnp.float32)

    z, kl = jax.jit(variational_encoder_forward)(params, x, noise)
    jax.block_until_ready((z, kl))

    z_ref, kl_ref = jax.jit(_reference_forward)(params, x, noise)
    jax.block_until_ready((z_ref, kl_ref))

    assert z.shape == (BATCH, LATENT_DIMS)
    assert jnp.isfinite(z).all() and jnp.isfinite(kl)
    assert jnp.allclose(z, z_ref, rtol=2e-2, atol=2e-2), (z, z_ref)
    assert jnp.allclose(kl, kl_ref, rtol=2e-2, atol=5e-1), (kl, kl_ref)
    print("KERNEL_OK")
</pallas_src>

<mosaic_0001>
module attributes {stable_mosaic.version = 11 : i64} {
  func.func @kernel(%arg0: memref<10x882xf32, #tpu.memory_space<vmem>>, %arg1: memref<49x81xf32, #tpu.memory_space<vmem>>, %arg2: memref<200x288xf32, #tpu.memory_space<vmem>>, %arg3: memref<232x1xf32, #tpu.memory_space<vmem>>, %arg4: memref<8x2xf32, #tpu.memory_space<vmem>>, %arg5: memref<9x2xf32, #tpu.memory_space<vmem>>) attributes {dimension_semantics = [], scalar_prefetch = 0 : i64, scratch_operands = 0 : i64, tpu.core_type = #tpu.core_type<tc>} {
    %c0 = arith.constant 0 : index
    %c0_0 = arith.constant 0 : index
    %0 = vector.load %arg2[%c0, %c0_0] : memref<200x288xf32, #tpu.memory_space<vmem>>, vector<8x9xf32>
    %c8 = arith.constant 8 : index
    %c0_1 = arith.constant 0 : index
    %1 = vector.load %arg2[%c8, %c0_1] : memref<200x288xf32, #tpu.memory_space<vmem>>, vector<16x72xf32>
    %c24 = arith.constant 24 : index
    %c0_2 = arith.constant 0 : index
    %2 = vector.load %arg2[%c24, %c0_2] : memref<200x288xf32, #tpu.memory_space<vmem>>, vector<32x144xf32>
    %c56 = arith.constant 56 : index
    %c0_3 = arith.constant 0 : index
    %3 = vector.load %arg2[%c56, %c0_3] : memref<200x288xf32, #tpu.memory_space<vmem>>, vector<16x128xf32>
    %c72 = arith.constant 72 : index
    %c0_4 = arith.constant 0 : index
    %4 = vector.load %arg2[%c72, %c0_4] : memref<200x288xf32, #tpu.memory_space<vmem>>, vector<128x288xf32>
    %c0_5 = arith.constant 0 : index
    %c0_6 = arith.constant 0 : index
    %5 = vector.load %arg3[%c0_5, %c0_6] : memref<232x1xf32, #tpu.memory_space<vmem>>, vector<8x1xf32>
    %c8_7 = arith.constant 8 : index
    %c0_8 = arith.constant 0 : index
    %6 = vector.load %arg3[%c8_7, %c0_8] : memref<232x1xf32, #tpu.memory_space<vmem>>, vector<16x1xf32>
    %c24_9 = arith.constant 24 : index
    %c0_10 = arith.constant 0 : index
    %7 = vector.load %arg3[%c24_9, %c0_10] : memref<232x1xf32, #tpu.memory_space<vmem>>, vector<16x1xf32>
    %c40 = arith.constant 40 : index
    %c0_11 = arith.constant 0 : index
    %8 = vector.load %arg3[%c40, %c0_11] : memref<232x1xf32, #tpu.memory_space<vmem>>, vector<16x1xf32>
    %c56_12 = arith.constant 56 : index
    %c0_13 = arith.constant 0 : index
    %9 = vector.load %arg3[%c56_12, %c0_13] : memref<232x1xf32, #tpu.memory_space<vmem>>, vector<32x1xf32>
    %c88 = arith.constant 88 : index
    %c0_14 = arith.constant 0 : index
    %10 = vector.load %arg3[%c88, %c0_14] : memref<232x1xf32, #tpu.memory_space<vmem>>, vector<128x1xf32>
    %c216 = arith.constant 216 : index
    %c0_15 = arith.constant 0 : index
    %11 = vector.load %arg3[%c216, %c0_15] : memref<232x1xf32, #tpu.memory_space<vmem>>, vector<16x1xf32>
    %c0_16 = arith.constant 0 : index
    %c0_17 = arith.constant 0 : index
    %12 = vector.load %arg0[%c0_16, %c0_17] : memref<10x882xf32, #tpu.memory_space<vmem>>, vector<9x882xf32>
    %c9 = arith.constant 9 : index
    %c0_18 = arith.constant 0 : index
    %13 = vector.load %arg0[%c9, %c0_18] : memref<10x882xf32, #tpu.memory_space<vmem>>, vector<1x882xf32>
    %cst = arith.constant dense<0.000000e+00> : vector<8x882xf32>
    %14 = tpu.matmul %0, %12, %cst {dimension_numbers = #tpu.dot_dimension_numbers<[1], [0], [0], [1], [0, 0, 1, 1], [], []>} : vector<8x9xf32>, vector<9x882xf32>, vector<8x882xf32> -> vector<8x882xf32>
    %15 = vector.broadcast %5 : vector<8x1xf32> to vector<8x882xf32>
    %16 = arith.addf %14, %15 : vector<8x882xf32>
    %cst_19 = arith.constant 0.000000e+00 : f32
    %17 = vector.broadcast %cst_19 : f32 to vector<8x882xf32>
    %18 = arith.maximumf %16, %17 : vector<8x882xf32>
    %19 = vector.broadcast %13 : vector<1x882xf32> to vector<8x882xf32>
    %20 = arith.mulf %18, %19 : vector<8x882xf32>
    %21 = vector.extract_strided_slice %20 {offsets = [0, 0], sizes = [8, 98], strides = [1, 1]} : vector<8x882xf32> to vector<8x98xf32>
    %22 = vector.extract_strided_slice %20 {offsets = [0, 98], sizes = [8, 98], strides = [1, 1]} : vector<8x882xf32> to vector<8x98xf32>
    %23 = vector.extract_strided_slice %20 {offsets = [0, 196], sizes = [8, 98], strides = [1, 1]} : vector<8x882xf32> to vector<8x98xf32>
    %24 = vector.extract_strided_slice %20 {offsets = [0, 294], sizes = [8, 98], strides = [1, 1]} : vector<8x882xf32> to vector<8x98xf32>
    %25 = vector.extract_strided_slice %20 {offsets = [0, 392], sizes = [8, 98], strides = [1, 1]} : vector<8x882xf32> to vector<8x98xf32>
    %26 = vector.extract_strided_slice %20 {offsets = [0, 490], sizes = [8, 98], strides = [1, 1]} : vector<8x882xf32> to vector<8x98xf32>
    %27 = vector.extract_strided_slice %20 {offsets = [0, 588], sizes = [8, 98], strides = [1, 1]} : vector<8x882xf32> to vector<8x98xf32>
    %28 = vector.extract_strided_slice %20 {offsets = [0, 686], sizes = [8, 98], strides = [1, 1]} : vector<8x882xf32> to vector<8x98xf32>
    %29 = vector.extract_strided_slice %20 {offsets = [0, 784], sizes = [8, 98], strides = [1, 1]} : vector<8x882xf32> to vector<8x98xf32>
    %30 = tpu.concatenate %21, %22, %23, %24, %25, %26, %27, %28, %29 in 0 : vector<8x98xf32>, vector<8x98xf32>, vector<8x98xf32>, vector<8x98xf32>, vector<8x98xf32>, vector<8x98xf32>, vector<8x98xf32>, vector<8x98xf32>, vector<8x98xf32> -> vector<72x98xf32>
    %cst_20 = arith.constant dense<0.000000e+00> : vector<16x98xf32>
    %31 = tpu.matmul %1, %30, %cst_20 {dimension_numbers = #tpu.dot_dimension_numbers<[1], [0], [0], [1], [0, 0, 1, 1], [], []>} : vector<16x72xf32>, vector<72x98xf32>, vector<16x98xf32> -> vector<16x98xf32>
    %32 = vector.broadcast %6 : vector<16x1xf32> to vector<16x98xf32>
    %33 = arith.addf %31, %32 : vector<16x98xf32>
    %cst_21 = arith.constant dense<0.000000e+00> : vector<16xf32>
    %34 = vector.multi_reduction <add>, %33, %cst_21 [1] : vector<16x98xf32> to vector<16xf32>
    %35 = vector.shape_cast %34 : vector<16xf32> to vector<16x1xf32>
    %cst_22 = arith.constant 0.0102040814 : f32
    %36 = vector.broadcast %cst_22 : f32 to vector<16x1xf32>
    %37 = arith.mulf %35, %36 : vector<16x1xf32>
    %38 = arith.mulf %33, %33 : vector<16x98xf32>
    %cst_23 = arith.constant dense<0.000000e+00> : vector<16xf32>
    %39 = vector.multi_reduction <add>, %38, %cst_23 [1] : vector<16x98xf32> to vector<16xf32>
    %40 = vector.shape_cast %39 : vector<16xf32> to vector<16x1xf32>
    %cst_24 = arith.constant 0.0102040814 : f32
    %41 = vector.broadcast %cst_24 : f32 to vector<16x1xf32>
    %42 = arith.mulf %40, %41 : vector<16x1xf32>
    %43 = arith.mulf %37, %37 : vector<16x1xf32>
    %44 = arith.subf %42, %43 : vector<16x1xf32>
    %cst_25 = arith.constant 0.000000e+00 : f32
    %45 = vector.broadcast %cst_25 : f32 to vector<16x1xf32>
    %46 = arith.maximumf %44, %45 : vector<16x1xf32>
    %47 = vector.broadcast %37 : vector<16x1xf32> to vector<16x98xf32>
    %48 = arith.subf %33, %47 : vector<16x98xf32>
    %cst_26 = arith.constant 9.99999974E-6 : f32
    %49 = vector.broadcast %cst_26 : f32 to vector<16x1xf32>
    %50 = arith.addf %46, %49 : vector<16x1xf32>
    %51 = math.rsqrt %50 : vector<16x1xf32>
    %52 = vector.broadcast %51 : vector<16x1xf32> to vector<16x98xf32>
    %53 = arith.mulf %48, %52 : vector<16x98xf32>
    %54 = vector.broadcast %7 : vector<16x1xf32> to vector<16x98xf32>
    %55 = arith.mulf %53, %54 : vector<16x98xf32>
    %56 = vector.broadcast %8 : vector<16x1xf32> to vector<16x98xf32>
    %57 = arith.addf %55, %56 : vector<16x98xf32>
    %cst_27 = arith.constant 0.000000e+00 : f32
    %58 = vector.broadcast %cst_27 : f32 to vector<16x98xf32>
    %59 = arith.maximumf %57, %58 : vector<16x98xf32>
    %60 = vector.extract_strided_slice %59 {offsets = [0, 0], sizes = [16, 49], strides = [1, 1]} : vector<16x98xf32> to vector<16x49xf32>
    %c0_28 = arith.constant 0 : index
    %c0_29 = arith.constant 0 : index
    %61 = vector.load %arg1[%c0_28, %c0_29] : memref<49x81xf32, #tpu.memory_space<vmem>>, vector<49x81xf32>
    %cst_30 = arith.constant dense<0.000000e+00> : vector<16x81xf32>
    %62 = tpu.matmul %60, %61, %cst_30 {dimension_numbers = #tpu.dot_dimension_numbers<[1], [0], [0], [1], [0, 0, 1, 1], [], []>} : vector<16x49xf32>, vector<49x81xf32>, vector<16x81xf32> -> vector<16x81xf32>
    %63 = vector.extract_strided_slice %62 {offsets = [0, 0], sizes = [16, 9], strides = [1, 1]} : vector<16x81xf32> to vector<16x9xf32>
    %64 = vector.extract_strided_slice %62 {offsets = [0, 9], sizes = [16, 9], strides = [1, 1]} : vector<16x81xf32> to vector<16x9xf32>
    %65 = vector.extract_strided_slice %62 {offsets = [0, 18], sizes = [16, 9], strides = [1, 1]} : vector<16x81xf32> to vector<16x9xf32>
    %66 = vector.extract_strided_slice %62 {offsets = [0, 27], sizes = [16, 9], strides = [1, 1]} : vector<16x81xf32> to vector<16x9xf32>
    %67 = vector.extract_strided_slice %62 {offsets = [0, 36], sizes = [16, 9], strides = [1, 1]} : vector<16x81xf32> to vector<16x9xf32>
    %68 = vector.extract_strided_slice %62 {offsets = [0, 45], sizes = [16, 9], strides = [1, 1]} : vector<16x81xf32> to vector<16x9xf32>
    %69 = vector.extract_strided_slice %62 {offsets = [0, 54], sizes = [16, 9], strides = [1, 1]} : vector<16x81xf32> to vector<16x9xf32>
    %70 = vector.extract_strided_slice %62 {offsets = [0, 63], sizes = [16, 9], strides = [1, 1]} : vector<16x81xf32> to vector<16x9xf32>
    %71 = vector.extract_strided_slice %62 {offsets = [0, 72], sizes = [16, 9], strides = [1, 1]} : vector<16x81xf32> to vector<16x9xf32>
    %72 = tpu.concatenate %63, %64, %65, %66, %67, %68, %69, %70, %71 in 0 : vector<16x9xf32>, vector<16x9xf32>, vector<16x9xf32>, vector<16x9xf32>, vector<16x9xf32>, vector<16x9xf32>, vector<16x9xf32>, vector<16x9xf32>, vector<16x9xf32> -> vector<144x9xf32>
    %73 = vector.extract_strided_slice %59 {offsets = [0, 49], sizes = [16, 49], strides = [1, 1]} : vector<16x98xf32> to vector<16x49xf32>
    %c0_31 = arith.constant 0 : index
    %c0_32 = arith.constant 0 : index
    %74 = vector.load %arg1[%c0_31, %c0_32] : memref<49x81xf32, #tpu.memory_space<vmem>>, vector<49x81xf32>
    %cst_33 = arith.constant dense<0.000000e+00> : vector<16x81xf32>
    %75 = tpu.matmul %73, %74, %cst_33 {dimension_numbers = #tpu.dot_dimension_numbers<[1], [0], [0], [1], [0, 0, 1, 1], [], []>} : vector<16x49xf32>, vector<49x81xf32>, vector<16x81xf32> -> vector<16x81xf32>
    %76 = vector.extract_strided_slice %75 {offsets = [0, 0], sizes = [16, 9], strides = [1, 1]} : vector<16x81xf32> to vector<16x9xf32>
    %77 = vector.extract_strided_slice %75 {offsets = [0, 9], sizes = [16, 9], strides = [1, 1]} : vector<16x81xf32> to vector<16x9xf32>
    %78 = vector.extract_strided_slice %75 {offsets = [0, 18], sizes = [16, 9], strides = [1, 1]} : vector<16x81xf32> to vector<16x9xf32>
    %79 = vector.extract_strided_slice %75 {offsets = [0, 27], sizes = [16, 9], strides = [1, 1]} : vector<16x81xf32> to vector<16x9xf32>
    %80 = vector.extract_strided_slice %75 {offsets = [0, 36], sizes = [16, 9], strides = [1, 1]} : vector<16x81xf32> to vector<16x9xf32>
    %81 = vector.extract_strided_slice %75 {offsets = [0, 45], sizes = [16, 9], strides = [1, 1]} : vector<16x81xf32> to vector<16x9xf32>
    %82 = vector.extract_strided_slice %75 {offsets = [0, 54], sizes = [16, 9], strides = [1, 1]} : vector<16x81xf32> to vector<16x9xf32>
    %83 = vector.extract_strided_slice %75 {offsets = [0, 63], sizes = [16, 9], strides = [1, 1]} : vector<16x81xf32> to vector<16x9xf32>
    %84 = vector.extract_strided_slice %75 {offsets = [0, 72], sizes = [16, 9], strides = [1, 1]} : vector<16x81xf32> to vector<16x9xf32>
    %85 = tpu.concatenate %76, %77, %78, %79, %80, %81, %82, %83, %84 in 0 : vector<16x9xf32>, vector<16x9xf32>, vector<16x9xf32>, vector<16x9xf32>, vector<16x9xf32>, vector<16x9xf32>, vector<16x9xf32>, vector<16x9xf32>, vector<16x9xf32> -> vector<144x9xf32>
    %86 = tpu.concatenate %72, %85 in 1 : vector<144x9xf32>, vector<144x9xf32> -> vector<144x18xf32>
    %cst_34 = arith.constant dense<0.000000e+00> : vector<32x18xf32>
    %87 = tpu.matmul %2, %86, %cst_34 {dimension_numbers = #tpu.dot_dimension_numbers<[1], [0], [0], [1], [0, 0, 1, 1], [], []>} : vector<32x144xf32>, vector<144x18xf32>, vector<32x18xf32> -> vector<32x18xf32>
    %88 = vector.broadcast %9 : vector<32x1xf32> to vector<32x18xf32>
    %89 = arith.addf %87, %88 : vector<32x18xf32>
    %cst_35 = arith.constant 0.000000e+00 : f32
    %90 = vector.broadcast %cst_35 : f32 to vector<32x18xf32>
    %91 = arith.maximumf %89, %90 : vector<32x18xf32>
    %92 = vector.extract_strided_slice %91 {offsets = [0, 0], sizes = [32, 1], strides = [1, 1]} : vector<32x18xf32> to vector<32x1xf32>
    %93 = vector.extract_strided_slice %91 {offsets = [0, 1], sizes = [32, 1], strides = [1, 1]} : vector<32x18xf32> to vector<32x1xf32>
    %94 = vector.extract_strided_slice %91 {offsets = [0, 2], sizes = [32, 1], strides = [1, 1]} : vector<32x18xf32> to vector<32x1xf32>
    %95 = vector.extract_strided_slice %91 {offsets = [0, 3], sizes = [32, 1], strides = [1, 1]} : vector<32x18xf32> to vector<32x1xf32>
    %96 = vector.extract_strided_slice %91 {offsets = [0, 4], sizes = [32, 1], strides = [1, 1]} : vector<32x18xf32> to vector<32x1xf32>
    %97 = vector.extract_strided_slice %91 {offsets = [0, 5], sizes = [32, 1], strides = [1, 1]} : vector<32x18xf32> to vector<32x1xf32>
    %98 = vector.extract_strided_slice %91 {offsets = [0, 6], sizes = [32, 1], strides = [1, 1]} : vector<32x18xf32> to vector<32x1xf32>
    %99 = vector.extract_strided_slice %91 {offsets = [0, 7], sizes = [32, 1], strides = [1, 1]} : vector<32x18xf32> to vector<32x1xf32>
    %100 = vector.extract_strided_slice %91 {offsets = [0, 8], sizes = [32, 1], strides = [1, 1]} : vector<32x18xf32> to vector<32x1xf32>
    %101 = tpu.concatenate %92, %93, %94, %95, %96, %97, %98, %99, %100 in 0 : vector<32x1xf32>, vector<32x1xf32>, vector<32x1xf32>, vector<32x1xf32>, vector<32x1xf32>, vector<32x1xf32>, vector<32x1xf32>, vector<32x1xf32>, vector<32x1xf32> -> vector<288x1xf32>
    %102 = vector.extract_strided_slice %91 {offsets = [0, 9], sizes = [32, 1], strides = [1, 1]} : vector<32x18xf32> to vector<32x1xf32>
    %103 = vector.extract_strided_slice %91 {offsets = [0, 10], sizes = [32, 1], strides = [1, 1]} : vector<32x18xf32> to vector<32x1xf32>
    %104 = vector.extract_strided_slice %91 {offsets = [0, 11], sizes = [32, 1], strides = [1, 1]} : vector<32x18xf32> to vector<32x1xf32>
    %105 = vector.extract_strided_slice %91 {offsets = [0, 12], sizes = [32, 1], strides = [1, 1]} : vector<32x18xf32> to vector<32x1xf32>
    %106 = vector.extract_strided_slice %91 {offsets = [0, 13], sizes = [32, 1], strides = [1, 1]} : vector<32x18xf32> to vector<32x1xf32>
    %107 = vector.extract_strided_slice %91 {offsets = [0, 14], sizes = [32, 1], strides = [1, 1]} : vector<32x18xf32> to vector<32x1xf32>
    %108 = vector.extract_strided_slice %91 {offsets = [0, 15], sizes = [32, 1], strides = [1, 1]} : vector<32x18xf32> to vector<32x1xf32>
    %109 = vector.extract_strided_slice %91 {offsets = [0, 16], sizes = [32, 1], strides = [1, 1]} : vector<32x18xf32> to vector<32x1xf32>
    %110 = vector.extract_strided_slice %91 {offsets = [0, 17], sizes = [32, 1], strides = [1, 1]} : vector<32x18xf32> to vector<32x1xf32>
    %111 = tpu.concatenate %102, %103, %104, %105, %106, %107, %108, %109, %110 in 0 : vector<32x1xf32>, vector<32x1xf32>, vector<32x1xf32>, vector<32x1xf32>, vector<32x1xf32>, vector<32x1xf32>, vector<32x1xf32>, vector<32x1xf32>, vector<32x1xf32> -> vector<288x1xf32>
    %112 = tpu.concatenate %101, %111 in 1 : vector<288x1xf32>, vector<288x1xf32> -> vector<288x2xf32>
    %cst_36 = arith.constant dense<0.000000e+00> : vector<128x2xf32>
    %113 = tpu.matmul %4, %112, %cst_36 {dimension_numbers = #tpu.dot_dimension_numbers<[1], [0], [0], [1], [0, 0, 1, 1], [], []>} : vector<128x288xf32>, vector<288x2xf32>, vector<128x2xf32> -> vector<128x2xf32>
    %114 = vector.broadcast %10 : vector<128x1xf32> to vector<128x2xf32>
    %115 = arith.addf %113, %114 : vector<128x2xf32>
    %cst_37 = arith.constant 0.000000e+00 : f32
    %116 = vector.broadcast %cst_37 : f32 to vector<128x2xf32>
    %117 = arith.maximumf %115, %116 : vector<128x2xf32>
    %cst_38 = arith.constant dense<0.000000e+00> : vector<16x2xf32>
    %118 = tpu.matmul %3, %117, %cst_38 {dimension_numbers = #tpu.dot_dimension_numbers<[1], [0], [0], [1], [0, 0, 1, 1], [], []>} : vector<16x128xf32>, vector<128x2xf32>, vector<16x2xf32> -> vector<16x2xf32>
    %119 = vector.broadcast %11 : vector<16x1xf32> to vector<16x2xf32>
    %120 = arith.addf %118, %119 : vector<16x2xf32>
    %121 = vector.extract_strided_slice %120 {offsets = [0, 0], sizes = [8, 2], strides = [1, 1]} : vector<16x2xf32> to vector<8x2xf32>
    %122 = vector.extract_strided_slice %120 {offsets = [8, 0], sizes = [8, 2], strides = [1, 1]} : vector<16x2xf32> to vector<8x2xf32>
    %123 = math.exp %122 : vector<8x2xf32>
    %c0_39 = arith.constant 0 : index
    %c0_40 = arith.constant 0 : index
    %124 = vector.load %arg4[%c0_39, %c0_40] : memref<8x2xf32, #tpu.memory_space<vmem>>, vector<8x2xf32>
    %125 = arith.mulf %123, %124 : vector<8x2xf32>
    %126 = arith.addf %121, %125 : vector<8x2xf32>
    %127 = arith.mulf %123, %123 : vector<8x2xf32>
    %128 = arith.mulf %121, %121 : vector<8x2xf32>
    %129 = arith.addf %127, %128 : vector<8x2xf32>
    %130 = arith.subf %129, %122 : vector<8x2xf32>
    %cst_41 = arith.constant 5.000000e-01 : f32
    %131 = vector.broadcast %cst_41 : f32 to vector<8x2xf32>
    %132 = arith.subf %130, %131 : vector<8x2xf32>
    %cst_42 = arith.constant dense<0.000000e+00> : vector<8xf32>
    %133 = vector.multi_reduction <add>, %132, %cst_42 [1] : vector<8x2xf32> to vector<8xf32>
    %134 = vector.shape_cast %133 : vector<8xf32> to vector<8x1xf32>
    %cst_43 = arith.constant dense<0.000000e+00> : vector<1xf32>
    %135 = vector.multi_reduction <add>, %134, %cst_43 [0] : vector<8x1xf32> to vector<1xf32>
    %136 = vector.shape_cast %135 : vector<1xf32> to vector<1x1xf32>
    %137 = vector.shape_cast %136 : vector<1x1xf32> to vector<1x1xf32>
    %138 = vector.broadcast %137 : vector<1x1xf32> to vector<1x2xf32>
    %139 = tpu.concatenate %126, %138 in 0 : vector<8x2xf32>, vector<1x2xf32> -> vector<9x2xf32>
    %c0_44 = arith.constant 0 : index
    %c0_45 = arith.constant 0 : index
    %140 = vector.load %arg5[%c0_44, %c0_45] : memref<9x2xf32, #tpu.memory_space<vmem>>, vector<9x2xf32>
    tpu.vector_store %arg5[%c0_44, %c0_45], %139 {strides = array<i32>} : memref<9x2xf32, #tpu.memory_space<vmem>>, vector<9x2xf32>,
    return
  }
}

</mosaic_0001>

<llo_original>
// kernel: variational_encoder_forward.1
$region0: #{variational_encoder_forward.1}
  #allocation0 [shape = 'u32[]', space=smem, size = 0x4, offset = 0x4, fixed_abs, tag = 'smem constant byte address 0x4 - core index']
  #allocation1 [shape = 'u32[144,128]{1,0:T(1,128)}', space=vmem, size = 0x12000, scoped, tag = 'internal scratch']
  %s0 = inlined_call_operand.vmem [shape: f32[10,882], index: 0, kind: input, shape index: {}]
  %s1 = inlined_call_operand.vmem [shape: f32[49,81], index: 1, kind: input, shape index: {}]
  %s2 = inlined_call_operand.vmem [shape: f32[200,288], index: 2, kind: input, shape index: {}]
  %s3 = inlined_call_operand.vmem [shape: f32[232,1], index: 3, kind: input, shape index: {}]
  %s4 = inlined_call_operand.vmem [shape: f32[8,2], index: 4, kind: input, shape index: {}]
  %s5 = inlined_call_operand.vmem [shape: f32[9,2], index: 5, kind: output, shape index: {}]
  %s6 = sld [smem:[#allocation0]]
  $region30: #{variational_encoder_forward.1} parent=0
    _
  %s8 = ssub.s32 1, %s6
  %s9 = scalar_select 0, %s8, %s6
  // Predicated region
  $region2: #{variational_encoder_forward.1} parent=0 // pred_check
    _
  $region3: #{variational_encoder_forward.1} parent=0 // pred_check_branch
    %11 = sbr.rel (0) target = $region5
  $region4: #{variational_encoder_forward.1} parent=0 // pred_region
    _
  $region5: #{variational_encoder_forward.1} parent=0 // pred_fallthru
    _
  // Predicated region
  $region6: #{variational_encoder_forward.1} parent=0 // pred_check
    _
  $region7: #{variational_encoder_forward.1} parent=0 // pred_check_branch
    %13 = sbr.rel (0) target = $region9
  $region8: #{variational_encoder_forward.1} parent=0 // pred_region
    _
  $region9: #{variational_encoder_forward.1} parent=0 // pred_fallthru
    _
  // Predicated region
  $region10: #{variational_encoder_forward.1} parent=0 // pred_check
    _
  $region11: #{variational_encoder_forward.1} parent=0 // pred_check_branch
    %15 = sbr.rel (0) target = $region13
  $region12: #{variational_encoder_forward.1} parent=0 // pred_region
    _
  $region13: #{variational_encoder_forward.1} parent=0 // pred_fallthru
    _
  // Predicated region
  $region14: #{variational_encoder_forward.1} parent=0 // pred_check
    _
  $region15: #{variational_encoder_forward.1} parent=0 // pred_check_branch
    %17 = sbr.rel (0) target = $region17
  $region16: #{variational_encoder_forward.1} parent=0 // pred_region
    _
  $region17: #{variational_encoder_forward.1} parent=0 // pred_fallthru
    _
  // Predicated region
  $region18: #{variational_encoder_forward.1} parent=0 // pred_check
    _
  $region19: #{variational_encoder_forward.1} parent=0 // pred_check_branch
    %19 = sbr.rel (0) target = $region21
  $region20: #{variational_encoder_forward.1} parent=0 // pred_region
    _
  $region21: #{variational_encoder_forward.1} parent=0 // pred_fallthru
    _
  %v20 = vld [vmem:[%s2] sm:$0xff]
  %v21 = vld [vmem:[%s2 + $0x18] sm:$0xff]
  %v22 = vld [vmem:[%s2 + $0x30] sm:$0xff]
  %v23 = vld [vmem:[%s2 + $0x48] sm:$0xff]
  %v24 = vld [vmem:[%s2 + $0x50] sm:$0xff]
  %v25 = vld [vmem:[%s2 + $0x60] sm:$0xff]
  %v26 = vld [vmem:[%s2 + $0x68] sm:$0xff]
  %v27 = vld [vmem:[%s2 + $0x78] sm:$0xff]
  %v28 = vld [vmem:[%s2 + $0x80] sm:$0xff]
  %v29 = vld [vmem:[%s2 + $0x90] sm:$0xff]
  %v30 = vld [vmem:[%s2 + $0x98] sm:$0xff]
  %v31 = vld [vmem:[%s2 + $0xa8] sm:$0xff]
  %v32 = vld [vmem:[%s2 + $0xc0] sm:$0xff]
  %v33 = vld [vmem:[%s2 + $0xd8] sm:$0xff]
  %v34 = vld [vmem:[%s2 + $0xe0] sm:$0xff]
  %v35 = vld [vmem:[%s2 + $0xe8] sm:$0xff]
  %v36 = vld [vmem:[%s2 + $0xf0] sm:$0xff]
  %v37 = vld [vmem:[%s2 + $0xf8] sm:$0xff]
  %v38 = vld [vmem:[%s2 + $0x100] sm:$0xff]
  %v39 = vld [vmem:[%s2 + $0x108] sm:$0xff]
  %v40 = vld [vmem:[%s2 + $0x110] sm:$0xff]
  %v41 = vld [vmem:[%s2 + $0x118] sm:$0xff]
  %v42 = vld [vmem:[%s2 + $0x120] sm:$0xff]
  %v43 = vld [vmem:[%s2 + $0x128] sm:$0xff]
  %v44 = vld [vmem:[%s2 + $0x130] sm:$0xff]
  %v45 = vld [vmem:[%s2 + $0x138] sm:$0xff]
  %v46 = vld [vmem:[%s2 + $0x140] sm:$0xff]
  %v47 = vld [vmem:[%s2 + $0x148] sm:$0xff]
  %v48 = vld [vmem:[%s2 + $0x150] sm:$0xff]
  %v49 = vld [vmem:[%s2 + $0x158] sm:$0xff]
  %v50 = vld [vmem:[%s2 + $0x160] sm:$0xff]
  %v51 = vld [vmem:[%s2 + $0x168] sm:$0xff]
  %v52 = vld [vmem:[%s2 + $0x170] sm:$0xff]
  %v53 = vld [vmem:[%s2 + $0x178] sm:$0xff]
  %v54 = vld [vmem:[%s2 + $0x180] sm:$0xff]
  %v55 = vld [vmem:[%s2 + $0x188] sm:$0xff]
  %v56 = vld [vmem:[%s2 + $0x190] sm:$0xff]
  %v57 = vld [vmem:[%s2 + $0x198] sm:$0xff]
  %v58 = vld [vmem:[%s2 + $0x1a0] sm:$0xff]
  %v59 = vld [vmem:[%s2 + $0x1a8] sm:$0xff]
  %v60 = vld [vmem:[%s2 + $0x1b0] sm:$0xff]
  %v61 = vld [vmem:[%s2 + $0x1b8] sm:$0xff]
  %v62 = vld [vmem:[%s2 + $0x1c0] sm:$0xff]
  %v63 = vld [vmem:[%s2 + $0x1c8] sm:$0xff]
  %v64 = vld [vmem:[%s2 + $0x1d0] sm:$0xff]
  %v65 = vld [vmem:[%s2 + $0x1d8] sm:$0xff]
  %v66 = vld [vmem:[%s2 + $0x1e0] sm:$0xff]
  %v67 = vld [vmem:[%s2 + $0x1e8] sm:$0xff]
  %v68 = vld [vmem:[%s2 + $0x1f0] sm:$0xff]
  %v69 = vld [vmem:[%s2 + $0x1f8] sm:$0xff]
  %v70 = vld [vmem:[%s2 + $0x200] sm:$0xff]
  %v71 = vld [vmem:[%s2 + $0x208] sm:$0xff]
  %v72 = vld [vmem:[%s2 + $0x210] sm:$0xff]
  %v73 = vld [vmem:[%s2 + $0x218] sm:$0xff]
  %v74 = vld [vmem:[%s2 + $0x220] sm:$0xff]
  %v75 = vld [vmem:[%s2 + $0x228] sm:$0xff]
  %v76 = vld [vmem:[%s2 + $0x230] sm:$0xff]
  %v77 = vld [vmem:[%s2 + $0x238] sm:$0xff]
  %v78 = vld [vmem:[%s2 + $0x240] sm:$0xff]
  %v79 = vld [vmem:[%s2 + $0x248] sm:$0xff]
  %v80 = vld [vmem:[%s2 + $0x250] sm:$0xff]
  %v81 = vld [vmem:[%s3] sm:$0xff]
  %v82 = vld [vmem:[%s3 + $0x8] sm:$0xff]
  %v83 = vld [vmem:[%s3 + $0x10] sm:$0xff]
  %v84 = vld [vmem:[%s3 + $0x18] sm:$0xff]
  %v85 = vld [vmem:[%s3 + $0x20] sm:$0xff]
  %v86 = vld [vmem:[%s3 + $0x28] sm:$0xff]
  %v87 = vld [vmem:[%s3 + $0x30] sm:$0xff]
  %v88 = vld [vmem:[%s3 + $0x38] sm:$0xff]
  %v89 = vld [vmem:[%s3 + $0x40] sm:$0xff]
  %v90 = vld [vmem:[%s3 + $0x48] sm:$0xff]
  %v91 = vld [vmem:[%s3 + $0x50] sm:$0xff]
  %v92 = vld [vmem:[%s3 + $0x58] sm:$0xff]
  %v93 = vld [vmem:[%s3 + $0x60] sm:$0xff]
  %v94 = vld [vmem:[%s3 + $0x68] sm:$0xff]
  %v95 = vld [vmem:[%s3 + $0x70] sm:$0xff]
  %v96 = vld [vmem:[%s3 + $0x78] sm:$0xff]
  %v97 = vld [vmem:[%s3 + $0x80] sm:$0xff]
  %v98 = vld [vmem:[%s3 + $0x88] sm:$0xff]
  %v99 = vld [vmem:[%s3 + $0x90] sm:$0xff]
  %v100 = vld [vmem:[%s3 + $0x98] sm:$0xff]
  %v101 = vld [vmem:[%s3 + $0xa0] sm:$0xff]
  %v102 = vld [vmem:[%s3 + $0xa8] sm:$0xff]
  %v103 = vld [vmem:[%s3 + $0xb0] sm:$0xff]
  %v104 = vld [vmem:[%s3 + $0xb8] sm:$0xff]
  %v105 = vld [vmem:[%s3 + $0xc0] sm:$0xff]
  %v106 = vld [vmem:[%s3 + $0xc8] sm:$0xff]
  %v107 = vld [vmem:[%s3 + $0xd0] sm:$0xff]
  %v108 = vld [vmem:[%s3 + $0xd8] sm:$0xff]
  %v109 = vld [vmem:[%s3 + $0xe0] sm:$0xff]
  %v110 = vld [vmem:[%s0] sm:$0xff]
  %v111 = vld [vmem:[%s0 + $0x8] sm:$0xff]
  %v112 = vld [vmem:[%s0 + $0x10] sm:$0xff]
  %v113 = vld [vmem:[%s0 + $0x18] sm:$0xff]
  %v114 = vld [vmem:[%s0 + $0x20] sm:$0xff]
  %v115 = vld [vmem:[%s0 + $0x28] sm:$0xff]
  %v116 = vld [vmem:[%s0 + $0x30] sm:$0xff]
  %v117 = vld [vmem:[%s0 + $0x38] sm:$0x1]
  %v118 = vld [vmem:[%s0 + $0x40] sm:$0x1]
  %v119 = vld [vmem:[%s0 + $0x48] sm:$0x1]
  %v120 = vld [vmem:[%s0 + $0x50] sm:$0x1]
  %v121 = vld [vmem:[%s0 + $0x58] sm:$0x1]
  %v122 = vld [vmem:[%s0 + $0x60] sm:$0x1]
  %v123 = vld [vmem:[%s0 + $0x68] sm:$0x1]
  %s124 = scalar_lea.vmem %s0, 57
  %v125 = vld [vmem:[%s124] ss:$8 sm:$0xf]
  %v126 = vld [vmem:[%s124] ss:$8 sm:$0x70]
  %v127 = vor.u32 %v125, %v126
  %129 = vset.pattern.permute.xlu0 0
  %130 = vperm.xlu0 %129, %v81
  %v131 = vpop.permute.xlu0 %130
  %vm133 = vcmask 72704
  %v135 = vsel %vm133, %v20, 0
  %vm137 = vcmask 1040384
  %v139 = vsel %vm137, %v117, 0
  %v142 = vsel %vm137, %v118, 0
  %v145 = vsel %vm137, %v119, 0
  %v148 = vsel %vm137, %v120, 0
  %v151 = vsel %vm137, %v121, 0
  %v154 = vsel %vm137, %v122, 0
  %v157 = vsel %vm137, %v123, 0
  %159 = vmatprep.subr.mxu0 %v111
  %160 = vmatpush1.msra.mxu0 %v110
  %161 = vmatprep.subr.mxu0 %v142
  %162 = vmatpush1.msra.mxu0 %v139
  %163 = vmatprep.subr.mxu0 0.0
  %164 = vmatpush1.msra.mxu0 0.0
  %165 = vmatprep.subr.mxu0 0.0
  %166 = vmatpush1.msra.mxu0 0.0
  %167 = vmatprep.subr.mxu0 0.0
  %168 = vmatpush1.msra.mxu0 0.0
  %169 = vmatprep.subr.mxu0 0.0
  %170 = vmatpush1.msra.mxu0 0.0
  %171 = vmatprep.subr.mxu0 0.0
  %172 = vmatpush1.msra.mxu0 0.0
  %173 = vmatprep.subr.mxu0 0.0
  %174 = vmatpush1.msra.mxu0 0.0
  %175 = vmatprep.subr.mxu0 0.0
  %176 = vmatpush1.msra.mxu0 0.0
  %177 = vmatprep.subr.mxu0 0.0
  %178 = vmatpush1.msra.mxu0 0.0
  %179 = vmatprep.subr.mxu0 0.0
  %180 = vmatpush1.msra.mxu0 0.0
  %181 = vmatprep.subr.mxu0 0.0
  %182 = vmatpush1.msra.mxu0 0.0
  %183 = vmatprep.subr.mxu0 0.0
  %184 = vmatpush1.msra.mxu0 0.0
  %185 = vmatprep.subr.mxu0 0.0
  %186 = vmatpush1.msra.mxu0 0.0
  %187 = vmatprep.subr.mxu0 0.0
  %188 = vmatpush1.msra.mxu0 0.0
  %189 = vmatprep.subr.mxu0 0.0
  %190 = vmatpush1.msra.mxu0 0.0
  %191 = vmatprep.subr.mxu0 0.0
  %192 = vmatpush1.msra.mxu0 0.0
  %193 = vmatprep.subr.mxu0 0.0
  %194 = vmatpush1.msra.mxu0 0.0
  %195 = vmatprep.subr.mxu0 0.0
  %196 = vmatpush1.msra.mxu0 0.0
  %197 = vmatprep.subr.mxu0 0.0
  %198 = vmatpush1.msra.mxu0 0.0
  %199 = vmatprep.subr.mxu0 0.0
  %200 = vmatpush1.msra.mxu0 0.0
  %201 = vmatprep.subr.mxu0 0.0
  %202 = vmatpush1.msra.mxu0 0.0
  %203 = vmatprep.subr.mxu0 0.0
  %204 = vmatpush1.msra.mxu0 0.0
  %205 = vmatprep.subr.mxu0 0.0
  %206 = vmatpush1.msra.mxu0 0.0
  %207 = vmatprep.subr.mxu0 0.0
  %208 = vmatpush1.msra.mxu0 0.0
  %209 = vmatprep.subr.mxu0 0.0
  %210 = vmatpush1.msra.mxu0 0.0
  %211 = vmatprep.subr.mxu0 0.0
  %212 = vmatpush1.msra.mxu0 0.0
  %213 = vmatprep.subr.mxu0 0.0
  %214 = vmatpush1.msra.mxu0 0.0
  %215 = vmatprep.subr.mxu0 0.0
  %216 = vmatpush1.msra.mxu0 0.0
  %217 = vmatprep.subr.mxu0 0.0
  %218 = vmatpush1.msra.mxu0 0.0
  %219 = vmatprep.subr.mxu0 0.0
  %220 = vmatpush1.msra.mxu0 0.0
  %221 = vmatprep.subr.mxu0 0.0
  %222 = vmatpush1.msra.mxu0 0.0
  %223 = vmatprep.mubr.f32.mxu0 0.0
  %224 = vmatmul.mubr.f32.gmra.mrb[0].mxu0 %v135
  %v225 = vpop.f32.mrb[0].mxu0
  %v226 = vadd.f32 %v131, %v225
  %v227 = vpop.f32.mrb[0].mxu0
  %v228 = vadd.f32 %v131, %v227
  %229 = vdwg.mxu0
  %230 = vmatprep.subr.mxu0 %v113
  %231 = vmatpush1.msra.mxu0 %v112
  %232 = vmatprep.subr.mxu0 %v148
  %233 = vmatpush1.msra.mxu0 %v145
  %234 = vmatprep.subr.mxu0 0.0
  %235 = vmatpush1.msra.mxu0 0.0
  %236 = vmatprep.subr.mxu0 0.0
  %237 = vmatpush1.msra.mxu0 0.0
  %238 = vmatprep.subr.mxu0 0.0
  %239 = vmatpush1.msra.mxu0 0.0
  %240 = vmatprep.subr.mxu0 0.0
  %241 = vmatpush1.msra.mxu0 0.0
  %242 = vmatprep.subr.mxu0 0.0
  %243 = vmatpush1.msra.mxu0 0.0
  %244 = vmatprep.subr.mxu0 0.0
  %245 = vmatpush1.msra.mxu0 0.0
  %246 = vmatprep.subr.mxu0 0.0
  %247 = vmatpush1.msra.mxu0 0.0
  %248 = vmatprep.subr.mxu0 0.0
  %249 = vmatpush1.msra.mxu0 0.0
  %250 = vmatprep.subr.mxu0 0.0
  %251 = vmatpush1.msra.mxu0 0.0
  %252 = vmatprep.subr.mxu0 0.0
  %253 = vmatpush1.msra.mxu0 0.0
  %254 = vmatprep.subr.mxu0 0.0
  %255 = vmatpush1.msra.mxu0 0.0
  %256 = vmatprep.subr.mxu0 0.0
  %257 = vmatpush1.msra.mxu0 0.0
  %258 = vmatprep.subr.mxu0 0.0
  %259 = vmatpush1.msra.mxu0 0.0
  %260 = vmatprep.subr.mxu0 0.0
  %261 = vmatpush1.msra.mxu0 0.0
  %262 = vmatprep.subr.mxu0 0.0
  %263 = vmatpush1.msra.mxu0 0.0
  %264 = vmatprep.subr.mxu0 0.0
  %265 = vmatpush1.msra.mxu0 0.0
  %266 = vmatprep.subr.mxu0 0.0
  %267 = vmatpush1.msra.mxu0 0.0
  %268 = vmatprep.subr.mxu0 0.0
  %269 = vmatpush1.msra.mxu0 0.0
  %270 = vmatprep.subr.mxu0 0.0
  %271 = vmatpush1.msra.mxu0 0.0
  %272 = vmatprep.subr.mxu0 0.0
  %273 = vmatpush1.msra.mxu0 0.0
  %274 = vmatprep.subr.mxu0 0.0
  %275 = vmatpush1.msra.mxu0 0.0
  %276 = vmatprep.subr.mxu0 0.0
  %277 = vmatpush1.msra.mxu0 0.0
  %278 = vmatprep.subr.mxu0 0.0
  %279 = vmatpush1.msra.mxu0 0.0
  %280 = vmatprep.subr.mxu0 0.0
  %281 = vmatpush1.msra.mxu0 0.0
  %282 = vmatprep.subr.mxu0 0.0
  %283 = vmatpush1.msra.mxu0 0.0
  %284 = vmatprep.subr.mxu0 0.0
  %285 = vmatpush1.msra.mxu0 0.0
  %286 = vmatprep.subr.mxu0 0.0
  %287 = vmatpush1.msra.mxu0 0.0
  %288 = vmatprep.subr.mxu0 0.0
  %289 = vmatpush1.msra.mxu0 0.0
  %290 = vmatprep.subr.mxu0 0.0
  %291 = vmatpush1.msra.mxu0 0.0
  %292 = vmatprep.subr.mxu0 0.0
  %293 = vmatpush1.msra.mxu0 0.0
  %294 = vmatprep.mubr.f32.mxu0 0.0
  %295 = vmatmul.mubr.f32.gmra.mrb[0].mxu0 %v135
  %v296 = vpop.f32.mrb[0].mxu0
  %v297 = vadd.f32 %v131, %v296
  %v298 = vpop.f32.mrb[0].mxu0
  %v299 = vadd.f32 %v131, %v298
  %300 = vdwg.mxu0
  %301 = vmatprep.subr.mxu0 %v115
  %302 = vmatpush1.msra.mxu0 %v114
  %303 = vmatprep.subr.mxu0 %v154
  %304 = vmatpush1.msra.mxu0 %v151
  %305 = vmatprep.subr.mxu0 0.0
  %306 = vmatpush1.msra.mxu0 0.0
  %307 = vmatprep.subr.mxu0 0.0
  %308 = vmatpush1.msra.mxu0 0.0
  %309 = vmatprep.subr.mxu0 0.0
  %310 = vmatpush1.msra.mxu0 0.0
  %311 = vmatprep.subr.mxu0 0.0
  %312 = vmatpush1.msra.mxu0 0.0
  %313 = vmatprep.subr.mxu0 0.0
  %314 = vmatpush1.msra.mxu0 0.0
  %315 = vmatprep.subr.mxu0 0.0
  %316 = vmatpush1.msra.mxu0 0.0
  %317 = vmatprep.subr.mxu0 0.0
  %318 = vmatpush1.msra.mxu0 0.0
  %319 = vmatprep.subr.mxu0 0.0
  %320 = vmatpush1.msra.mxu0 0.0
  %321 = vmatprep.subr.mxu0 0.0
  %322 = vmatpush1.msra.mxu0 0.0
  %323 = vmatprep.subr.mxu0 0.0
  %324 = vmatpush1.msra.mxu0 0.0
  %325 = vmatprep.subr.mxu0 0.0
  %326 = vmatpush1.msra.mxu0 0.0
  %327 = vmatprep.subr.mxu0 0.0
  %328 = vmatpush1.msra.mxu0 0.0
  %329 = vmatprep.subr.mxu0 0.0
  %330 = vmatpush1.msra.mxu0 0.0
  %331 = vmatprep.subr.mxu0 0.0
  %332 = vmatpush1.msra.mxu0 0.0
  %333 = vmatprep.subr.mxu0 0.0
  %334 = vmatpush1.msra.mxu0 0.0
  %335 = vmatprep.subr.mxu0 0.0
  %336 = vmatpush1.msra.mxu0 0.0
  %337 = vmatprep.subr.mxu0 0.0
  %338 = vmatpush1.msra.mxu0 0.0
  %339 = vmatprep.subr.mxu0 0.0
  %340 = vmatpush1.msra.mxu0 0.0
  %341 = vmatprep.subr.mxu0 0.0
  %342 = vmatpush1.msra.mxu0 0.0
  %343 = vmatprep.subr.mxu0 0.0
  %344 = vmatpush1.msra.mxu0 0.0
  %345 = vmatprep.subr.mxu0 0.0
  %346 = vmatpush1.msra.mxu0 0.0
  %347 = vmatprep.subr.mxu0 0.0
  %348 = vmatpush1.msra.mxu0 0.0
  %349 = vmatprep.subr.mxu0 0.0
  %350 = vmatpush1.msra.mxu0 0.0
  %351 = vmatprep.subr.mxu0 0.0
  %352 = vmatpush1.msra.mxu0 0.0
  %353 = vmatprep.subr.mxu0 0.0
  %354 = vmatpush1.msra.mxu0 0.0
  %355 = vmatprep.subr.mxu0 0.0
  %356 = vmatpush1.msra.mxu0 0.0
  %357 = vmatprep.subr.mxu0 0.0
  %358 = vmatpush1.msra.mxu0 0.0
  %359 = vmatprep.subr.mxu0 0.0
  %360 = vmatpush1.msra.mxu0 0.0
  %361 = vmatprep.subr.mxu0 0.0
  %362 = vmatpush1.msra.mxu0 0.0
  %363 = vmatprep.subr.mxu0 0.0
  %364 = vmatpush1.msra.mxu0 0.0
  %365 = vmatprep.mubr.f32.mxu0 0.0
  %366 = vmatmul.mubr.f32.gmra.mrb[0].mxu0 %v135
  %v367 = vpop.f32.mrb[0].mxu0
  %v368 = vadd.f32 %v131, %v367
  %v369 = vpop.f32.mrb[0].mxu0
  %v370 = vadd.f32 %v131, %v369
  %371 = vdwg.mxu0
  %372 = vmatprep.subr.mxu0 0.0
  %373 = vmatpush1.msra.mxu0 %v116
  %374 = vmatprep.subr.mxu0 0.0
  %375 = vmatpush1.msra.mxu0 %v157
  %376 = vmatprep.subr.mxu0 0.0
  %377 = vmatpush1.msra.mxu0 0.0
  %378 = vmatprep.subr.mxu0 0.0
  %379 = vmatpush1.msra.mxu0 0.0
  %380 = vmatprep.subr.mxu0 0.0
  %381 = vmatpush1.msra.mxu0 0.0
  %382 = vmatprep.subr.mxu0 0.0
  %383 = vmatpush1.msra.mxu0 0.0
  %384 = vmatprep.subr.mxu0 0.0
  %385 = vmatpush1.msra.mxu0 0.0
  %386 = vmatprep.subr.mxu0 0.0
  %387 = vmatpush1.msra.mxu0 0.0
  %388 = vmatprep.subr.mxu0 0.0
  %389 = vmatpush1.msra.mxu0 0.0
  %390 = vmatprep.subr.mxu0 0.0
  %391 = vmatpush1.msra.mxu0 0.0
  %392 = vmatprep.subr.mxu0 0.0
  %393 = vmatpush1.msra.mxu0 0.0
  %394 = vmatprep.subr.mxu0 0.0
  %395 = vmatpush1.msra.mxu0 0.0
  %396 = vmatprep.subr.mxu0 0.0
  %397 = vmatpush1.msra.mxu0 0.0
  %398 = vmatprep.subr.mxu0 0.0
  %399 = vmatpush1.msra.mxu0 0.0
  %400 = vmatprep.subr.mxu0 0.0
  %401 = vmatpush1.msra.mxu0 0.0
  %402 = vmatprep.subr.mxu0 0.0
  %403 = vmatpush1.msra.mxu0 0.0
  %404 = vmatprep.subr.mxu0 0.0
  %405 = vmatpush1.msra.mxu0 0.0
  %406 = vmatprep.subr.mxu0 0.0
  %407 = vmatpush1.msra.mxu0 0.0
  %408 = vmatprep.subr.mxu0 0.0
  %409 = vmatpush1.msra.mxu0 0.0
  %410 = vmatprep.subr.mxu0 0.0
  %411 = vmatpush1.msra.mxu0 0.0
  %412 = vmatprep.subr.mxu0 0.0
  %413 = vmatpush1.msra.mxu0 0.0
  %414 = vmatprep.subr.mxu0 0.0
  %415 = vmatpush1.msra.mxu0 0.0
  %416 = vmatprep.subr.mxu0 0.0
  %417 = vmatpush1.msra.mxu0 0.0
  %418 = vmatprep.subr.mxu0 0.0
  %419 = vmatpush1.msra.mxu0 0.0
  %420 = vmatprep.subr.mxu0 0.0
  %421 = vmatpush1.msra.mxu0 0.0
  %422 = vmatprep.subr.mxu0 0.0
  %423 = vmatpush1.msra.mxu0 0.0
  %424 = vmatprep.subr.mxu0 0.0
  %425 = vmatpush1.msra.mxu0 0.0
  %426 = vmatprep.subr.mxu0 0.0
  %427 = vmatpush1.msra.mxu0 0.0
  %428 = vmatprep.subr.mxu0 0.0
  %429 = vmatpush1.msra.mxu0 0.0
  %430 = vmatprep.subr.mxu0 0.0
  %431 = vmatpush1.msra.mxu0 0.0
  %432 = vmatprep.subr.mxu0 0.0
  %433 = vmatpush1.msra.mxu0 0.0
  %434 = vmatprep.subr.mxu0 0.0
  %435 = vmatpush1.msra.mxu0 0.0
  %436 = vmatprep.mubr.f32.mxu0 0.0
  %437 = vmatmul.mubr.f32.gmra.mrb[0].mxu0 %v135
  %v438 = vpop.f32.mrb[0].mxu0
  %v439 = vadd.f32 %v131, %v438
  %v440 = vpop.f32.mrb[0].mxu0
  %441 = vdwg.mxu0
  %v442 = vmax.f32 %v226, 0.0
  %v443 = vmax.f32 %v228, 0.0
  %v444 = vmax.f32 %v297, 0.0
  %v445 = vmax.f32 %v299, 0.0
  %v446 = vmax.f32 %v368, 0.0
  %v447 = vmax.f32 %v370, 0.0
  %v448 = vmax.f32 %v439, 0.0
  %v450 = vlaneseq
  %v451 = vshrl.u32 %v450, 7
  %v452 = vsub.s32 0, %v451
  %v453 = vrot.slane %v127, %v452
  %v454 = vlaneseq
  %v455 = vshrl.u32 %v454, 7
  %v456 = vsub.s32 1, %v455
  %v457 = vrot.slane %v127, %v456
  %v458 = vlaneseq
  %v459 = vshrl.u32 %v458, 7
  %v460 = vsub.s32 2, %v459
  %v461 = vrot.slane %v127, %v460
  %v462 = vlaneseq
  %v463 = vshrl.u32 %v462, 7
  %v464 = vsub.s32 3, %v463
  %v465 = vrot.slane %v127, %v464
  %v466 = vlaneseq
  %v467 = vshrl.u32 %v466, 7
  %v468 = vsub.s32 4, %v467
  %v469 = vrot.slane %v127, %v468
  %v470 = vlaneseq
  %v471 = vshrl.u32 %v470, 7
  %v472 = vsub.s32 5, %v471
  %v473 = vrot.slane %v127, %v472
  %v474 = vlaneseq
  %v475 = vshrl.u32 %v474, 7
  %v476 = vsub.s32 6, %v475
  %v477 = vrot.slane %v127, %v476
  %v485 = vmul.f32 %v442, %v453
  %v486 = vmul.f32 %v443, %v457
  %v487 = vmul.f32 %v444, %v461
  %v488 = vmul.f32 %v445, %v465
  %v489 = vmul.f32 %v446, %v469
  %v490 = vmul.f32 %v447, %v473
  %v491 = vmul.f32 %v448, %v477
  %494 = vrot.lane.b32.xlu0 %v485, 30
  %v495 = vpop.permute.xlu0 %494
  %496 = vrot.lane.b32.xlu0 %v486, 30
  %v497 = vpop.permute.xlu0 %496
  %vm498 = vcmask 244736
  %v499 = vsel %vm498, %v495, %v497
  %502 = vrot.lane.b32.xlu0 %v486, 60
  %v503 = vpop.permute.xlu0 %502
  %504 = vrot.lane.b32.xlu0 %v487, 60
  %v505 = vpop.permute.xlu0 %504
  %vm506 = vcmask 490496
  %v507 = vsel %vm506, %v503, %v505
  %510 = vrot.lane.b32.xlu0 %v487, 90
  %v511 = vpop.permute.xlu0 %510
  %512 = vrot.lane.b32.xlu0 %v488, 90
  %v513 = vpop.permute.xlu0 %512
  %vm514 = vcmask 736256
  %v515 = vsel %vm514, %v511, %v513
  %517 = vrot.lane.b32.xlu0 %v488, 120
  %v518 = vpop.permute.xlu0 %517
  %521 = vrot.lane.b32.xlu0 %v488, 22
  %v522 = vpop.permute.xlu0 %521
  %523 = vrot.lane.b32.xlu0 %v489, 22
  %v524 = vpop.permute.xlu0 %523
  %vm525 = vcmask 179200
  %v526 = vsel %vm525, %v522, %v524
  %529 = vrot.lane.b32.xlu0 %v489, 52
  %v530 = vpop.permute.xlu0 %529
  %531 = vrot.lane.b32.xlu0 %v490, 52
  %v532 = vpop.permute.xlu0 %531
  %vm533 = vcmask 424960
  %v534 = vsel %vm533, %v530, %v532
  %537 = vrot.lane.b32.xlu0 %v490, 82
  %v538 = vpop.permute.xlu0 %537
  %539 = vrot.lane.b32.xlu0 %v491, 82
  %v540 = vpop.permute.xlu0 %539
  %vm541 = vcmask 670720
  %v542 = vsel %vm541, %v538, %v540
  %544 = vrot.lane.b32.xlu0 %v491, 112
  %v545 = vpop.permute.xlu0 %544
  %548 = vset.pattern.permute.xlu0 0
  %549 = vperm.xlu0 %548, %v82
  %v550 = vpop.permute.xlu0 %549
  %553 = vset.pattern.permute.xlu0 0
  %554 = vperm.xlu0 %553, %v83
  %v555 = vpop.permute.xlu0 %554
  %vm557 = vcmask 588800
  %v559 = vsel %vm557, %v21, 0
  %v562 = vsel %vm557, %v22, 0
  %564 = vmatprep.subr.mxu0 0.0
  %565 = vmatpush1.msra.mxu0 %v485
  %566 = vmatprep.subr.mxu0 0.0
  %567 = vmatpush1.msra.mxu0 %v499
  %568 = vmatprep.subr.mxu0 0.0
  %569 = vmatpush1.msra.mxu0 %v507
  %570 = vmatprep.subr.mxu0 0.0
  %571 = vmatpush1.msra.mxu0 %v515
  %572 = vmatprep.subr.mxu0 0.0
  %573 = vmatpush1.msra.mxu0 %v518
  %574 = vmatprep.subr.mxu0 0.0
  %575 = vmatpush1.msra.mxu0 %v526
  %576 = vmatprep.subr.mxu0 0.0
  %577 = vmatpush1.msra.mxu0 %v534
  %578 = vmatprep.subr.mxu0 0.0
  %579 = vmatpush1.msra.mxu0 %v542
  %580 = vmatprep.subr.mxu0 0.0
  %581 = vmatpush1.msra.mxu0 %v545
  %582 = vmatprep.subr.mxu0 0.0
  %583 = vmatpush1.msra.mxu0 0.0
  %584 = vmatprep.subr.mxu0 0.0
  %585 = vmatpush1.msra.mxu0 0.0
  %586 = vmatprep.subr.mxu0 0.0
  %587 = vmatpush1.msra.mxu0 0.0
  %588 = vmatprep.subr.mxu0 0.0
  %589 = vmatpush1.msra.mxu0 0.0
  %590 = vmatprep.subr.mxu0 0.0
  %591 = vmatpush1.msra.mxu0 0.0
  %592 = vmatprep.subr.mxu0 0.0
  %593 = vmatpush1.msra.mxu0 0.0
  %594 = vmatprep.subr.mxu0 0.0
  %595 = vmatpush1.msra.mxu0 0.0
  %596 = vmatprep.subr.mxu0 0.0
  %597 = vmatpush1.msra.mxu0 0.0
  %598 = vmatprep.subr.mxu0 0.0
  %599 = vmatpush1.msra.mxu0 0.0
  %600 = vmatprep.subr.mxu0 0.0
  %601 = vmatpush1.msra.mxu0 0.0
  %602 = vmatprep.subr.mxu0 0.0
  %603 = vmatpush1.msra.mxu0 0.0
  %604 = vmatprep.subr.mxu0 0.0
  %605 = vmatpush1.msra.mxu0 0.0
  %606 = vmatprep.subr.mxu0 0.0
  %607 = vmatpush1.msra.mxu0 0.0
  %608 = vmatprep.subr.mxu0 0.0
  %609 = vmatpush1.msra.mxu0 0.0
  %610 = vmatprep.subr.mxu0 0.0
  %611 = vmatpush1.msra.mxu0 0.0
  %612 = vmatprep.subr.mxu0 0.0
  %613 = vmatpush1.msra.mxu0 0.0
  %614 = vmatprep.subr.mxu0 0.0
  %615 = vmatpush1.msra.mxu0 0.0
  %616 = vmatprep.subr.mxu0 0.0
  %617 = vmatpush1.msra.mxu0 0.0
  %618 = vmatprep.subr.mxu0 0.0
  %619 = vmatpush1.msra.mxu0 0.0
  %620 = vmatprep.subr.mxu0 0.0
  %621 = vmatpush1.msra.mxu0 0.0
  %622 = vmatprep.subr.mxu0 0.0
  %623 = vmatpush1.msra.mxu0 0.0
  %624 = vmatprep.subr.mxu0 0.0
  %625 = vmatpush1.msra.mxu0 0.0
  %626 = vmatprep.subr.mxu0 0.0
  %627 = vmatpush1.msra.mxu0 0.0
  %628 = vmatprep.mubr.f32.mxu0 0.0
  %629 = vmatmul.mubr.f32.gmra.mrb[0].mxu0 %v559
  %v630 = vpop.f32.mrb[0].mxu0
  %v631 = vadd.f32 %v550, %v630
  %v632 = vpop.f32.mrb[0].mxu0
  %633 = vmatprep.mubr.f32.mxu0 0.0
  %634 = vmatmul.mubr.f32.gmra.mrb[0].mxu0 %v562
  %v635 = vpop.f32.mrb[0].mxu0
  %v636 = vadd.f32 %v555, %v635
  %v637 = vpop.f32.mrb[0].mxu0
  %638 = vdwg.mxu0
  %vm639 = vcmask 801792
  %v640 = vsel %vm639, %v631, 0.0
  %641 = vadd.xlane.f32.xlu0 %v640
  %v642 = vpop.xlane.xlu0 %641
  %v643 = vsel %vm639, %v636, 0.0
  %644 = vadd.xlane.f32.xlu0 %v643
  %v645 = vpop.xlane.xlu0 %644
  %v646 = vmul.f32 %v642, 0.010204081
  %v647 = vmul.f32 %v645, 0.010204081
  %v648 = vmul.f32 %v631, %v631
  %v649 = vmul.f32 %v636, %v636
  %v650 = vsel %vm639, %v648, 0.0
  %651 = vadd.xlane.f32.xlu0 %v650
  %v652 = vpop.xlane.xlu0 %651
  %v653 = vsel %vm639, %v649, 0.0
  %654 = vadd.xlane.f32.xlu0 %v653
  %v655 = vpop.xlane.xlu0 %654
  %v656 = vmul.f32 %v652, 0.010204081
  %v657 = vmul.f32 %v655, 0.010204081
  %v658 = vmul.f32 %v646, %v646
  %v659 = vmul.f32 %v647, %v647
  %v660 = vsub.f32 %v656, %v658
  %v661 = vsub.f32 %v657, %v659
  %v662 = vmax.f32 %v660, 0.0
  %v663 = vmax.f32 %v661, 0.0
  %v664 = vsub.f32 %v631, %v646
  %v665 = vsub.f32 %v636, %v647
  %v666 = vadd.f32 %v662, 1e-05
  %v667 = vadd.f32 %v663, 1e-05
  %v668 = vrsqrt.pop %v666
  %v669 = vrsqrt.pop %v667
  %v670 = vmul.f32 %v664, %v668
  %v671 = vmul.f32 %v665, %v669
  %673 = vset.pattern.permute.xlu0 0
  %674 = vperm.xlu0 %673, %v84
  %v675 = vpop.permute.xlu0 %674
  %678 = vset.pattern.permute.xlu0 0
  %679 = vperm.xlu0 %678, %v85
  %v680 = vpop.permute.xlu0 %679
  %v682 = vmul.f32 %v670, %v675
  %v683 = vmul.f32 %v671, %v680
  %685 = vset.pattern.permute.xlu0 0
  %686 = vperm.xlu0 %685, %v86
  %v687 = vpop.permute.xlu0 %686
  %690 = vset.pattern.permute.xlu0 0
  %691 = vperm.xlu0 %690, %v87
  %v692 = vpop.permute.xlu0 %691
  %v694 = vadd.f32 %v682, %v687
  %v695 = vadd.f32 %v683, %v692
  %v696 = vmax.f32 %v694, 0.0
  %v697 = vmax.f32 %v695, 0.0
  %v698 = vld [vmem:[%s1] sm:$0xff]
  %v699 = vld [vmem:[%s1 + $0x8] sm:$0xff]
  %v700 = vld [vmem:[%s1 + $0x10] sm:$0xff]
  %v701 = vld [vmem:[%s1 + $0x18] sm:$0xff]
  %v702 = vld [vmem:[%s1 + $0x20] sm:$0xff]
  %v703 = vld [vmem:[%s1 + $0x28] sm:$0xff]
  %v704 = vld [vmem:[%s1 + $0x30] sm:$0x1]
  %vm705 = vcmask 400384
  %v707 = vsel %vm705, %v696, 0
  %v710 = vsel %vm705, %v697, 0
  %v713 = vsel %vm137, %v704, 0
  %715 = vmatprep.subr.mxu0 0.0
  %716 = vmatpush1.msra.mxu0 %v698
  %717 = vmatprep.subr.mxu0 0.0
  %718 = vmatpush1.msra.mxu0 %v699
  %719 = vmatprep.subr.mxu0 0.0
  %720 = vmatpush1.msra.mxu0 %v700
  %721 = vmatprep.subr.mxu0 0.0
  %722 = vmatpush1.msra.mxu0 %v701
  %723 = vmatprep.subr.mxu0 0.0
  %724 = vmatpush1.msra.mxu0 %v702
  %725 = vmatprep.subr.mxu0 0.0
  %726 = vmatpush1.msra.mxu0 %v703
  %727 = vmatprep.subr.mxu0 0.0
  %728 = vmatpush1.msra.mxu0 %v713
  %729 = vmatprep.subr.mxu0 0.0
  %730 = vmatpush1.msra.mxu0 0.0
  %731 = vmatprep.subr.mxu0 0.0
  %732 = vmatpush1.msra.mxu0 0.0
  %733 = vmatprep.subr.mxu0 0.0
  %734 = vmatpush1.msra.mxu0 0.0
  %735 = vmatprep.subr.mxu0 0.0
  %736 = vmatpush1.msra.mxu0 0.0
  %737 = vmatprep.subr.mxu0 0.0
  %738 = vmatpush1.msra.mxu0 0.0
  %739 = vmatprep.subr.mxu0 0.0
  %740 = vmatpush1.msra.mxu0 0.0
  %741 = vmatprep.subr.mxu0 0.0
  %742 = vmatpush1.msra.mxu0 0.0
  %743 = vmatprep.subr.mxu0 0.0
  %744 = vmatpush1.msra.mxu0 0.0
  %745 = vmatprep.subr.mxu0 0.0
  %746 = vmatpush1.msra.mxu0 0.0
  %747 = vmatprep.subr.mxu0 0.0
  %748 = vmatpush1.msra.mxu0 0.0
  %749 = vmatprep.subr.mxu0 0.0
  %750 = vmatpush1.msra.mxu0 0.0
  %751 = vmatprep.subr.mxu0 0.0
  %752 = vmatpush1.msra.mxu0 0.0
  %753 = vmatprep.subr.mxu0 0.0
  %754 = vmatpush1.msra.mxu0 0.0
  %755 = vmatprep.subr.mxu0 0.0
  %756 = vmatpush1.msra.mxu0 0.0
  %757 = vmatprep.subr.mxu0 0.0
  %758 = vmatpush1.msra.mxu0 0.0
  %759 = vmatprep.subr.mxu0 0.0
  %760 = vmatpush1.msra.mxu0 0.0
  %761 = vmatprep.subr.mxu0 0.0
  %762 = vmatpush1.msra.mxu0 0.0
  %763 = vmatprep.subr.mxu0 0.0
  %764 = vmatpush1.msra.mxu0 0.0
  %765 = vmatprep.subr.mxu0 0.0
  %766 = vmatpush1.msra.mxu0 0.0
  %767 = vmatprep.subr.mxu0 0.0
  %768 = vmatpush1.msra.mxu0 0.0
  %769 = vmatprep.subr.mxu0 0.0
  %770 = vmatpush1.msra.mxu0 0.0
  %771 = vmatprep.subr.mxu0 0.0
  %772 = vmatpush1.msra.mxu0 0.0
  %773 = vmatprep.subr.mxu0 0.0
  %774 = vmatpush1.msra.mxu0 0.0
  %775 = vmatprep.subr.mxu0 0.0
  %776 = vmatpush1.msra.mxu0 0.0
  %777 = vmatprep.subr.mxu0 0.0
  %778 = vmatpush1.msra.mxu0 0.0
  %779 = vmatprep.mubr.f32.mxu0 0.0
  %780 = vmatmul.mubr.f32.gmra.mrb[0].mxu0 %v707
  %v781 = vpop.f32.mrb[0].mxu0
  %v782 = vadd.f32 0.0, %v781
  %v783 = vpop.f32.mrb[0].mxu0
  %784 = vmatprep.mubr.f32.mxu0 0.0
  %785 = vmatmul.mubr.f32.gmra.mrb[0].mxu0 %v710
  %v786 = vpop.f32.mrb[0].mxu0
  %v787 = vadd.f32 0.0, %v786
  %v788 = vpop.f32.mrb[0].mxu0
  %789 = vdwg.mxu0
  %792 = vrot.lane.b32.xlu0 %v782, 119
  %v793 = vpop.permute.xlu0 %792
  %794 = vrot.lane.b32.xlu0 %v787, 119
  %v795 = vpop.permute.xlu0 %794
  %798 = vrot.lane.b32.xlu0 %v782, 110
  %v799 = vpop.permute.xlu0 %798
  %800 = vrot.lane.b32.xlu0 %v787, 110
  %v801 = vpop.permute.xlu0 %800
  %804 = vrot.lane.b32.xlu0 %v782, 101
  %v805 = vpop.permute.xlu0 %804
  %806 = vrot.lane.b32.xlu0 %v787, 101
  %v807 = vpop.permute.xlu0 %806
  %810 = vrot.lane.b32.xlu0 %v782, 92
  %v811 = vpop.permute.xlu0 %810
  %812 = vrot.lane.b32.xlu0 %v787, 92
  %v813 = vpop.permute.xlu0 %812
  %816 = vrot.lane.b32.xlu0 %v782, 83
  %v817 = vpop.permute.xlu0 %816
  %818 = vrot.lane.b32.xlu0 %v787, 83
  %v819 = vpop.permute.xlu0 %818
  %822 = vrot.lane.b32.xlu0 %v782, 74
  %v823 = vpop.permute.xlu0 %822
  %824 = vrot.lane.b32.xlu0 %v787, 74
  %v825 = vpop.permute.xlu0 %824
  %828 = vrot.lane.b32.xlu0 %v782, 65
  %v829 = vpop.permute.xlu0 %828
  %830 = vrot.lane.b32.xlu0 %v787, 65
  %v831 = vpop.permute.xlu0 %830
  %834 = vrot.lane.b32.xlu0 %v782, 56
  %v835 = vpop.permute.xlu0 %834
  %836 = vrot.lane.b32.xlu0 %v787, 56
  %v837 = vpop.permute.xlu0 %836
  %840 = vrot.lane.b32.xlu0 %v696, 79
  %v841 = vpop.permute.xlu0 %840
  %842 = vrot.lane.b32.xlu0 %v697, 79
  %v843 = vpop.permute.xlu0 %842
  %v844 = vsel %vm705, %v841, 0
  %v846 = vsel %vm705, %v843, 0
  %848 = vmatprep.subr.mxu0 0.0
  %849 = vmatpush1.msra.mxu0 %v698
  %850 = vmatprep.subr.mxu0 0.0
  %851 = vmatpush1.msra.mxu0 %v699
  %852 = vmatprep.subr.mxu0 0.0
  %853 = vmatpush1.msra.mxu0 %v700
  %854 = vmatprep.subr.mxu0 0.0
  %855 = vmatpush1.msra.mxu0 %v701
  %856 = vmatprep.subr.mxu0 0.0
  %857 = vmatpush1.msra.mxu0 %v702
  %858 = vmatprep.subr.mxu0 0.0
  %859 = vmatpush1.msra.mxu0 %v703
  %860 = vmatprep.subr.mxu0 0.0
  %861 = vmatpush1.msra.mxu0 %v713
  %862 = vmatprep.subr.mxu0 0.0
  %863 = vmatpush1.msra.mxu0 0.0
  %864 = vmatprep.subr.mxu0 0.0
  %865 = vmatpush1.msra.mxu0 0.0
  %866 = vmatprep.subr.mxu0 0.0
  %867 = vmatpush1.msra.mxu0 0.0
  %868 = vmatprep.subr.mxu0 0.0
  %869 = vmatpush1.msra.mxu0 0.0
  %870 = vmatprep.subr.mxu0 0.0
  %871 = vmatpush1.msra.mxu0 0.0
  %872 = vmatprep.subr.mxu0 0.0
  %873 = vmatpush1.msra.mxu0 0.0
  %874 = vmatprep.subr.mxu0 0.0
  %875 = vmatpush1.msra.mxu0 0.0
  %876 = vmatprep.subr.mxu0 0.0
  %877 = vmatpush1.msra.mxu0 0.0
  %878 = vmatprep.subr.mxu0 0.0
  %879 = vmatpush1.msra.mxu0 0.0
  %880 = vmatprep.subr.mxu0 0.0
  %881 = vmatpush1.msra.mxu0 0.0
  %882 = vmatprep.subr.mxu0 0.0
  %883 = vmatpush1.msra.mxu0 0.0
  %884 = vmatprep.subr.mxu0 0.0
  %885 = vmatpush1.msra.mxu0 0.0
  %886 = vmatprep.subr.mxu0 0.0
  %887 = vmatpush1.msra.mxu0 0.0
  %888 = vmatprep.subr.mxu0 0.0
  %889 = vmatpush1.msra.mxu0 0.0
  %890 = vmatprep.subr.mxu0 0.0
  %891 = vmatpush1.msra.mxu0 0.0
  %892 = vmatprep.subr.mxu0 0.0
  %893 = vmatpush1.msra.mxu0 0.0
  %894 = vmatprep.subr.mxu0 0.0
  %895 = vmatpush1.msra.mxu0 0.0
  %896 = vmatprep.subr.mxu0 0.0
  %897 = vmatpush1.msra.mxu0 0.0
  %898 = vmatprep.subr.mxu0 0.0
  %899 = vmatpush1.msra.mxu0 0.0
  %900 = vmatprep.subr.mxu0 0.0
  %901 = vmatpush1.msra.mxu0 0.0
  %902 = vmatprep.subr.mxu0 0.0
  %903 = vmatpush1.msra.mxu0 0.0
  %904 = vmatprep.subr.mxu0 0.0
  %905 = vmatpush1.msra.mxu0 0.0
  %906 = vmatprep.subr.mxu0 0.0
  %907 = vmatpush1.msra.mxu0 0.0
  %908 = vmatprep.subr.mxu0 0.0
  %909 = vmatpush1.msra.mxu0 0.0
  %910 = vmatprep.subr.mxu0 0.0
  %911 = vmatpush1.msra.mxu0 0.0
  %912 = vmatprep.mubr.f32.mxu0 0.0
  %913 = vmatmul.mubr.f32.gmra.mrb[0].mxu0 %v844
  %v914 = vpop.f32.mrb[0].mxu0
  %v915 = vadd.f32 0.0, %v914
  %v916 = vpop.f32.mrb[0].mxu0
  %917 = vmatprep.mubr.f32.mxu0 0.0
  %918 = vmatmul.mubr.f32.gmra.mrb[0].mxu0 %v846
  %v919 = vpop.f32.mrb[0].mxu0
  %v920 = vadd.f32 0.0, %v919
  %v921 = vpop.f32.mrb[0].mxu0
  %922 = vdwg.mxu0
  %925 = vrot.lane.b32.xlu0 %v915, 119
  %v926 = vpop.permute.xlu0 %925
  %927 = vrot.lane.b32.xlu0 %v920, 119
  %v928 = vpop.permute.xlu0 %927
  %929 = vrot.lane.b32.xlu0 %v915, 110
  %v930 = vpop.permute.xlu0 %929
  %931 = vrot.lane.b32.xlu0 %v920, 110
  %v932 = vpop.permute.xlu0 %931
  %933 = vrot.lane.b32.xlu0 %v915, 101
  %v934 = vpop.permute.xlu0 %933
  %935 = vrot.lane.b32.xlu0 %v920, 101
  %v936 = vpop.permute.xlu0 %935
  %937 = vrot.lane.b32.xlu0 %v915, 92
  %v938 = vpop.permute.xlu0 %937
  %939 = vrot.lane.b32.xlu0 %v920, 92
  %v940 = vpop.permute.xlu0 %939
  %941 = vrot.lane.b32.xlu0 %v915, 83
  %v942 = vpop.permute.xlu0 %941
  %943 = vrot.lane.b32.xlu0 %v920, 83
  %v944 = vpop.permute.xlu0 %943
  %945 = vrot.lane.b32.xlu0 %v915, 74
  %v946 = vpop.permute.xlu0 %945
  %947 = vrot.lane.b32.xlu0 %v920, 74
  %v948 = vpop.permute.xlu0 %947
  %949 = vrot.lane.b32.xlu0 %v915, 65
  %v950 = vpop.permute.xlu0 %949
  %951 = vrot.lane.b32.xlu0 %v920, 65
  %v952 = vpop.permute.xlu0 %951
  %953 = vrot.lane.b32.xlu0 %v915, 56
  %v954 = vpop.permute.xlu0 %953
  %955 = vrot.lane.b32.xlu0 %v920, 56
  %v956 = vpop.permute.xlu0 %955
  %957 = vrot.lane.b32.xlu0 %v915, 9
  %v958 = vpop.permute.xlu0 %957
  %959 = vrot.lane.b32.xlu0 %v920, 9
  %v960 = vpop.permute.xlu0 %959
  %961 = vrot.lane.b32.xlu0 %v926, 9
  %v962 = vpop.permute.xlu0 %961
  %963 = vrot.lane.b32.xlu0 %v928, 9
  %v964 = vpop.permute.xlu0 %963
  %965 = vrot.lane.b32.xlu0 %v930, 9
  %v966 = vpop.permute.xlu0 %965
  %967 = vrot.lane.b32.xlu0 %v932, 9
  %v968 = vpop.permute.xlu0 %967
  %969 = vrot.lane.b32.xlu0 %v934, 9
  %v970 = vpop.permute.xlu0 %969
  %971 = vrot.lane.b32.xlu0 %v936, 9
  %v972 = vpop.permute.xlu0 %971
  %973 = vrot.lane.b32.xlu0 %v938, 9
  %v974 = vpop.permute.xlu0 %973
  %975 = vrot.lane.b32.xlu0 %v940, 9
  %v976 = vpop.permute.xlu0 %975
  %977 = vrot.lane.b32.xlu0 %v942, 9
  %v978 = vpop.permute.xlu0 %977
  %979 = vrot.lane.b32.xlu0 %v944, 9
  %v980 = vpop.permute.xlu0 %979
  %981 = vrot.lane.b32.xlu0 %v946, 9
  %v982 = vpop.permute.xlu0 %981
  %983 = vrot.lane.b32.xlu0 %v948, 9
  %v984 = vpop.permute.xlu0 %983
  %985 = vrot.lane.b32.xlu0 %v950, 9
  %v986 = vpop.permute.xlu0 %985
  %987 = vrot.lane.b32.xlu0 %v952, 9
  %v988 = vpop.permute.xlu0 %987
  %989 = vrot.lane.b32.xlu0 %v954, 9
  %v990 = vpop.permute.xlu0 %989
  %991 = vrot.lane.b32.xlu0 %v956, 9
  %v992 = vpop.permute.xlu0 %991
  %v1011 = vsel %vm133, %v782, %v958
  %v1012 = vsel %vm133, %v787, %v960
  %v1013 = vsel %vm133, %v793, %v962
  %v1014 = vsel %vm133, %v795, %v964
  %v1015 = vsel %vm133, %v799, %v966
  %v1016 = vsel %vm133, %v801, %v968
  %v1017 = vsel %vm133, %v805, %v970
  %v1018 = vsel %vm133, %v807, %v972
  %v1019 = vsel %vm133, %v811, %v974
  %v1020 = vsel %vm133, %v813, %v976
  %v1021 = vsel %vm133, %v817, %v978
  %v1022 = vsel %vm133, %v819, %v980
  %v1023 = vsel %vm133, %v823, %v982
  %v1024 = vsel %vm133, %v825, %v984
  %v1025 = vsel %vm133, %v829, %v986
  %v1026 = vsel %vm133, %v831, %v988
  %v1027 = vsel %vm133, %v835, %v990
  %v1028 = vsel %vm133, %v837, %v992
  %1030 = vset.pattern.permute.xlu0 0
  %1031 = vperm.xlu0 %1030, %v88
  %v1032 = vpop.permute.xlu0 %1031
  %1035 = vset.pattern.permute.xlu0 0
  %1036 = vperm.xlu0 %1035, %v89
  %v1037 = vpop.permute.xlu0 %1036
  %1040 = vset.pattern.permute.xlu0 0
  %1041 = vperm.xlu0 %1040, %v90
  %v1042 = vpop.permute.xlu0 %1041
  %1045 = vset.pattern.permute.xlu0 0
  %1046 = vperm.xlu0 %1045, %v91
  %v1047 = vpop.permute.xlu0 %1046
  %vm1049 = vcmask 130048
  %v1051 = vsel %vm1049, %v24, 0
  %v1054 = vsel %vm1049, %v26, 0
  %v1057 = vsel %vm1049, %v28, 0
  %v1060 = vsel %vm1049, %v30, 0
  %1062 = vmatprep.subr.mxu0 0.0
  %1063 = vmatpush1.msra.mxu0 %v1011
  %1064 = vmatprep.subr.mxu0 0.0
  %1065 = vmatpush1.msra.mxu0 %v1012
  %1066 = vmatprep.subr.mxu0 0.0
  %1067 = vmatpush1.msra.mxu0 %v1013
  %1068 = vmatprep.subr.mxu0 0.0
  %1069 = vmatpush1.msra.mxu0 %v1014
  %1070 = vmatprep.subr.mxu0 0.0
  %1071 = vmatpush1.msra.mxu0 %v1015
  %1072 = vmatprep.subr.mxu0 0.0
  %1073 = vmatpush1.msra.mxu0 %v1016
  %1074 = vmatprep.subr.mxu0 0.0
  %1075 = vmatpush1.msra.mxu0 %v1017
  %1076 = vmatprep.subr.mxu0 0.0
  %1077 = vmatpush1.msra.mxu0 %v1018
  %1078 = vmatprep.subr.mxu0 0.0
  %1079 = vmatpush1.msra.mxu0 %v1019
  %1080 = vmatprep.subr.mxu0 0.0
  %1081 = vmatpush1.msra.mxu0 %v1020
  %1082 = vmatprep.subr.mxu0 0.0
  %1083 = vmatpush1.msra.mxu0 %v1021
  %1084 = vmatprep.subr.mxu0 0.0
  %1085 = vmatpush1.msra.mxu0 %v1022
  %1086 = vmatprep.subr.mxu0 0.0
  %1087 = vmatpush1.msra.mxu0 %v1023
  %1088 = vmatprep.subr.mxu0 0.0
  %1089 = vmatpush1.msra.mxu0 %v1024
  %1090 = vmatprep.subr.mxu0 0.0
  %1091 = vmatpush1.msra.mxu0 %v1025
  %1092 = vmatprep.subr.mxu0 0.0
  %1093 = vmatpush1.msra.mxu0 %v1026
  %1094 = vmatprep.subr.mxu0 0.0
  %1095 = vmatpush1.msra.mxu0 %v1027
  %1096 = vmatprep.subr.mxu0 0.0
  %1097 = vmatpush1.msra.mxu0 %v1028
  %1098 = vmatprep.subr.mxu0 0.0
  %1099 = vmatpush1.msra.mxu0 0.0
  %1100 = vmatprep.subr.mxu0 0.0
  %1101 = vmatpush1.msra.mxu0 0.0
  %1102 = vmatprep.subr.mxu0 0.0
  %1103 = vmatpush1.msra.mxu0 0.0
  %1104 = vmatprep.subr.mxu0 0.0
  %1105 = vmatpush1.msra.mxu0 0.0
  %1106 = vmatprep.subr.mxu0 0.0
  %1107 = vmatpush1.msra.mxu0 0.0
  %1108 = vmatprep.subr.mxu0 0.0
  %1109 = vmatpush1.msra.mxu0 0.0
  %1110 = vmatprep.subr.mxu0 0.0
  %1111 = vmatpush1.msra.mxu0 0.0
  %1112 = vmatprep.subr.mxu0 0.0
  %1113 = vmatpush1.msra.mxu0 0.0
  %1114 = vmatprep.subr.mxu0 0.0
  %1115 = vmatpush1.msra.mxu0 0.0
  %1116 = vmatprep.subr.mxu0 0.0
  %1117 = vmatpush1.msra.mxu0 0.0
  %1118 = vmatprep.subr.mxu0 0.0
  %1119 = vmatpush1.msra.mxu0 0.0
  %1120 = vmatprep.subr.mxu0 0.0
  %1121 = vmatpush1.msra.mxu0 0.0
  %1122 = vmatprep.subr.mxu0 0.0
  %1123 = vmatpush1.msra.mxu0 0.0
  %1124 = vmatprep.subr.mxu0 0.0
  %1125 = vmatpush1.msra.mxu0 0.0
  %1126 = vmatprep.mubr.f32.mxu0 %v1051
  %1127 = vmatmul.mubr.f32.gmra.mrb[0].mxu0 %v23
  %v1128 = vpop.f32.mrb[0].mxu0
  %v1129 = vadd.f32 %v1032, %v1128
  %v1130 = vpop.f32.mrb[0].mxu0
  %1131 = vmatprep.mubr.f32.mxu0 %v1054
  %1132 = vmatmul.mubr.f32.gmra.mrb[0].mxu0 %v25
  %v1133 = vpop.f32.mrb[0].mxu0
  %v1134 = vadd.f32 %v1037, %v1133
  %v1135 = vpop.f32.mrb[0].mxu0
  %1136 = vmatprep.mubr.f32.mxu0 %v1057
  %1137 = vmatmul.mubr.f32.gmra.mrb[0].mxu0 %v27
  %v1138 = vpop.f32.mrb[0].mxu0
  %v1139 = vadd.f32 %v1042, %v1138
  %v1140 = vpop.f32.mrb[0].mxu0
  %1141 = vmatprep.mubr.f32.mxu0 %v1060
  %1142 = vmatmul.mubr.f32.gmra.mrb[0].mxu0 %v29
  %v1143 = vpop.f32.mrb[0].mxu0
  %v1144 = vadd.f32 %v1047, %v1143
  %v1145 = vpop.f32.mrb[0].mxu0
  %1146 = vdwg.mxu0
  %v1147 = vmax.f32 %v1129, 0.0
  %v1148 = vmax.f32 %v1134, 0.0
  %v1149 = vmax.f32 %v1139, 0.0
  %v1150 = vmax.f32 %v1144, 0.0
  %1155 = vrot.lane.b32.xlu0 %v1147, 127
  %v1156 = vpop.permute.xlu0 %1155
  %1157 = vrot.lane.b32.xlu0 %v1148, 127
  %v1158 = vpop.permute.xlu0 %1157
  %1159 = vrot.lane.b32.xlu0 %v1149, 127
  %v1160 = vpop.permute.xlu0 %1159
  %1161 = vrot.lane.b32.xlu0 %v1150, 127
  %v1162 = vpop.permute.xlu0 %1161
  %1167 = vrot.lane.b32.xlu0 %v1147, 126
  %v1168 = vpop.permute.xlu0 %1167
  %1169 = vrot.lane.b32.xlu0 %v1148, 126
  %v1170 = vpop.permute.xlu0 %1169
  %1171 = vrot.lane.b32.xlu0 %v1149, 126
  %v1172 = vpop.permute.xlu0 %1171
  %1173 = vrot.lane.b32.xlu0 %v1150, 126
  %v1174 = vpop.permute.xlu0 %1173
  %1179 = vrot.lane.b32.xlu0 %v1147, 125
  %v1180 = vpop.permute.xlu0 %1179
  %1181 = vrot.lane.b32.xlu0 %v1148, 125
  %v1182 = vpop.permute.xlu0 %1181
  %1183 = vrot.lane.b32.xlu0 %v1149, 125
  %v1184 = vpop.permute.xlu0 %1183
  %1185 = vrot.lane.b32.xlu0 %v1150, 125
  %v1186 = vpop.permute.xlu0 %1185
  %1191 = vrot.lane.b32.xlu0 %v1147, 124
  %v1192 = vpop.permute.xlu0 %1191
  %1193 = vrot.lane.b32.xlu0 %v1148, 124
  %v1194 = vpop.permute.xlu0 %1193
  %1195 = vrot.lane.b32.xlu0 %v1149, 124
  %v1196 = vpop.permute.xlu0 %1195
  %1197 = vrot.lane.b32.xlu0 %v1150, 124
  %v1198 = vpop.permute.xlu0 %1197
  %1203 = vrot.lane.b32.xlu0 %v1147, 123
  %v1204 = vpop.permute.xlu0 %1203
  %1205 = vrot.lane.b32.xlu0 %v1148, 123
  %v1206 = vpop.permute.xlu0 %1205
  %1207 = vrot.lane.b32.xlu0 %v1149, 123
  %v1208 = vpop.permute.xlu0 %1207
  %1209 = vrot.lane.b32.xlu0 %v1150, 123
  %v1210 = vpop.permute.xlu0 %1209
  %1215 = vrot.lane.b32.xlu0 %v1147, 122
  %v1216 = vpop.permute.xlu0 %1215
  %1217 = vrot.lane.b32.xlu0 %v1148, 122
  %v1218 = vpop.permute.xlu0 %1217
  %1219 = vrot.lane.b32.xlu0 %v1149, 122
  %v1220 = vpop.permute.xlu0 %1219
  %1221 = vrot.lane.b32.xlu0 %v1150, 122
  %v1222 = vpop.permute.xlu0 %1221
  %1227 = vrot.lane.b32.xlu0 %v1147, 121
  %v1228 = vpop.permute.xlu0 %1227
  %1229 = vrot.lane.b32.xlu0 %v1148, 121
  %v1230 = vpop.permute.xlu0 %1229
  %1231 = vrot.lane.b32.xlu0 %v1149, 121
  %v1232 = vpop.permute.xlu0 %1231
  %1233 = vrot.lane.b32.xlu0 %v1150, 121
  %v1234 = vpop.permute.xlu0 %1233
  %1239 = vrot.lane.b32.xlu0 %v1147, 120
  %v1240 = vpop.permute.xlu0 %1239
  %1241 = vrot.lane.b32.xlu0 %v1148, 120
  %v1242 = vpop.permute.xlu0 %1241
  %1243 = vrot.lane.b32.xlu0 %v1149, 120
  %v1244 = vpop.permute.xlu0 %1243
  %1245 = vrot.lane.b32.xlu0 %v1150, 120
  %v1246 = vpop.permute.xlu0 %1245
  %1251 = vrot.lane.b32.xlu0 %v1156, 120
  %v1252 = vpop.permute.xlu0 %1251
  %1253 = vrot.lane.b32.xlu0 %v1158, 120
  %v1254 = vpop.permute.xlu0 %1253
  %1255 = vrot.lane.b32.xlu0 %v1160, 120
  %v1256 = vpop.permute.xlu0 %1255
  %1257 = vrot.lane.b32.xlu0 %v1162, 120
  %v1258 = vpop.permute.xlu0 %1257
  %1259 = vrot.lane.b32.xlu0 %v1168, 120
  %v1260 = vpop.permute.xlu0 %1259
  %1261 = vrot.lane.b32.xlu0 %v1170, 120
  %v1262 = vpop.permute.xlu0 %1261
  %1263 = vrot.lane.b32.xlu0 %v1172, 120
  %v1264 = vpop.permute.xlu0 %1263
  %1265 = vrot.lane.b32.xlu0 %v1174, 120
  %v1266 = vpop.permute.xlu0 %1265
  %1267 = vrot.lane.b32.xlu0 %v1180, 120
  %v1268 = vpop.permute.xlu0 %1267
  %1269 = vrot.lane.b32.xlu0 %v1182, 120
  %v1270 = vpop.permute.xlu0 %1269
  %1271 = vrot.lane.b32.xlu0 %v1184, 120
  %v1272 = vpop.permute.xlu0 %1271
  %1273 = vrot.lane.b32.xlu0 %v1186, 120
  %v1274 = vpop.permute.xlu0 %1273
  %1275 = vrot.lane.b32.xlu0 %v1192, 120
  %v1276 = vpop.permute.xlu0 %1275
  %1277 = vrot.lane.b32.xlu0 %v1194, 120
  %v1278 = vpop.permute.xlu0 %1277
  %1279 = vrot.lane.b32.xlu0 %v1196, 120
  %v1280 = vpop.permute.xlu0 %1279
  %1281 = vrot.lane.b32.xlu0 %v1198, 120
  %v1282 = vpop.permute.xlu0 %1281
  %1283 = vrot.lane.b32.xlu0 %v1204, 120
  %v1284 = vpop.permute.xlu0 %1283
  %1285 = vrot.lane.b32.xlu0 %v1206, 120
  %v1286 = vpop.permute.xlu0 %1285
  %1287 = vrot.lane.b32.xlu0 %v1208, 120
  %v1288 = vpop.permute.xlu0 %1287
  %1289 = vrot.lane.b32.xlu0 %v1210, 120
  %v1290 = vpop.permute.xlu0 %1289
  %1291 = vrot.lane.b32.xlu0 %v1216, 120
  %v1292 = vpop.permute.xlu0 %1291
  %1293 = vrot.lane.b32.xlu0 %v1218, 120
  %v1294 = vpop.permute.xlu0 %1293
  %1295 = vrot.lane.b32.xlu0 %v1220, 120
  %v1296 = vpop.permute.xlu0 %1295
  %1297 = vrot.lane.b32.xlu0 %v1222, 120
  %v1298 = vpop.permute.xlu0 %1297
  %1299 = vrot.lane.b32.xlu0 %v1228, 120
  %v1300 = vpop.permute.xlu0 %1299
  %1301 = vrot.lane.b32.xlu0 %v1230, 120
  %v1302 = vpop.permute.xlu0 %1301
  %1303 = vrot.lane.b32.xlu0 %v1232, 120
  %v1304 = vpop.permute.xlu0 %1303
  %1305 = vrot.lane.b32.xlu0 %v1234, 120
  %v1306 = vpop.permute.xlu0 %1305
  %1307 = vrot.lane.b32.xlu0 %v1240, 120
  %v1308 = vpop.permute.xlu0 %1307
  %1309 = vrot.lane.b32.xlu0 %v1242, 120
  %v1310 = vpop.permute.xlu0 %1309
  %1311 = vrot.lane.b32.xlu0 %v1244, 120
  %v1312 = vpop.permute.xlu0 %1311
  %1313 = vrot.lane.b32.xlu0 %v1246, 120
  %v1314 = vpop.permute.xlu0 %1313
  %vm1347 = vcmask 7168
  %v1348 = vsel %vm1347, %v1147, %v1240
  %v1349 = vsel %vm1347, %v1148, %v1242
  %v1350 = vsel %vm1347, %v1149, %v1244
  %v1351 = vsel %vm1347, %v1150, %v1246
  %v1352 = vsel %vm1347, %v1156, %v1252
  %v1353 = vsel %vm1347, %v1158, %v1254
  %v1354 = vsel %vm1347, %v1160, %v1256
  %v1355 = vsel %vm1347, %v1162, %v1258
  %v1356 = vsel %vm1347, %v1168, %v1260
  %v1357 = vsel %vm1347, %v1170, %v1262
  %v1358 = vsel %vm1347, %v1172, %v1264
  %v1359 = vsel %vm1347, %v1174, %v1266
  %v1360 = vsel %vm1347, %v1180, %v1268
  %v1361 = vsel %vm1347, %v1182, %v1270
  %v1362 = vsel %vm1347, %v1184, %v1272
  %v1363 = vsel %vm1347, %v1186, %v1274
  %v1364 = vsel %vm1347, %v1192, %v1276
  %v1365 = vsel %vm1347, %v1194, %v1278
  %v1366 = vsel %vm1347, %v1196, %v1280
  %v1367 = vsel %vm1347, %v1198, %v1282
  %v1368 = vsel %vm1347, %v1204, %v1284
  %v1369 = vsel %vm1347, %v1206, %v1286
  %v1370 = vsel %vm1347, %v1208, %v1288
  %v1371 = vsel %vm1347, %v1210, %v1290
  %v1372 = vsel %vm1347, %v1216, %v1292
  %v1373 = vsel %vm1347, %v1218, %v1294
  %v1374 = vsel %vm1347, %v1220, %v1296
  %v1375 = vsel %vm1347, %v1222, %v1298
  %v1376 = vsel %vm1347, %v1228, %v1300
  %v1377 = vsel %vm1347, %v1230, %v1302
  %v1378 = vsel %vm1347, %v1232, %v1304
  %v1379 = vsel %vm1347, %v1234, %v1306
  %v1380 = vsel %vm1347, %v1240, %v1308
  %v1381 = vsel %vm1347, %v1242, %v1310
  %v1382 = vsel %vm1347, %v1244, %v1312
  %v1383 = vsel %vm1347, %v1246, %v1314
  %1385 = vset.pattern.permute.xlu0 0
  %1386 = vperm.xlu0 %1385, %v92
  %v1387 = vpop.permute.xlu0 %1386
  %1390 = vset.pattern.permute.xlu0 0
  %1391 = vperm.xlu0 %1390, %v93
  %v1392 = vpop.permute.xlu0 %1391
  %1395 = vset.pattern.permute.xlu0 0
  %1396 = vperm.xlu0 %1395, %v94
  %v1397 = vpop.permute.xlu0 %1396
  %1400 = vset.pattern.permute.xlu0 0
  %1401 = vperm.xlu0 %1400, %v95
  %v1402 = vpop.permute.xlu0 %1401
  %1405 = vset.pattern.permute.xlu0 0
  %1406 = vperm.xlu0 %1405, %v96
  %v1407 = vpop.permute.xlu0 %1406
  %1410 = vset.pattern.permute.xlu0 0
  %1411 = vperm.xlu0 %1410, %v97
  %v1412 = vpop.permute.xlu0 %1411
  %1415 = vset.pattern.permute.xlu0 0
  %1416 = vperm.xlu0 %1415, %v98
  %v1417 = vpop.permute.xlu0 %1416
  %1420 = vset.pattern.permute.xlu0 0
  %1421 = vperm.xlu0 %1420, %v99
  %v1422 = vpop.permute.xlu0 %1421
  %1425 = vset.pattern.permute.xlu0 0
  %1426 = vperm.xlu0 %1425, %v100
  %v1427 = vpop.permute.xlu0 %1426
  %1430 = vset.pattern.permute.xlu0 0
  %1431 = vperm.xlu0 %1430, %v101
  %v1432 = vpop.permute.xlu0 %1431
  %1435 = vset.pattern.permute.xlu0 0
  %1436 = vperm.xlu0 %1435, %v102
  %v1437 = vpop.permute.xlu0 %1436
  %1440 = vset.pattern.permute.xlu0 0
  %1441 = vperm.xlu0 %1440, %v103
  %v1442 = vpop.permute.xlu0 %1441
  %1445 = vset.pattern.permute.xlu0 0
  %1446 = vperm.xlu0 %1445, %v104
  %v1447 = vpop.permute.xlu0 %1446
  %1450 = vset.pattern.permute.xlu0 0
  %1451 = vperm.xlu0 %1450, %v105
  %v1452 = vpop.permute.xlu0 %1451
  %1455 = vset.pattern.permute.xlu0 0
  %1456 = vperm.xlu0 %1455, %v106
  %v1457 = vpop.permute.xlu0 %1456
  %1460 = vset.pattern.permute.xlu0 0
  %1461 = vperm.xlu0 %1460, %v107
  %v1462 = vpop.permute.xlu0 %1461
  %vm1464 = vcmask 261120
  %v1466 = vsel %vm1464, %v35, 0
  %v1469 = vsel %vm1464, %v38, 0
  %v1472 = vsel %vm1464, %v41, 0
  %v1475 = vsel %vm1464, %v44, 0
  %v1478 = vsel %vm1464, %v47, 0
  %v1481 = vsel %vm1464, %v50, 0
  %v1484 = vsel %vm1464, %v53, 0
  %v1487 = vsel %vm1464, %v56, 0
  %v1490 = vsel %vm1464, %v59, 0
  %v1493 = vsel %vm1464, %v62, 0
  %v1496 = vsel %vm1464, %v65, 0
  %v1499 = vsel %vm1464, %v68, 0
  %v1502 = vsel %vm1464, %v71, 0
  %v1505 = vsel %vm1464, %v74, 0
  %v1508 = vsel %vm1464, %v77, 0
  %v1511 = vsel %vm1464, %v80, 0
  %1513 = vmatprep.subr.mxu0 0.0
  %1514 = vmatpush1.msra.mxu0 %v1348
  %1515 = vmatprep.subr.mxu0 0.0
  %1516 = vmatpush1.msra.mxu0 %v1349
  %1517 = vmatprep.subr.mxu0 0.0
  %1518 = vmatpush1.msra.mxu0 %v1350
  %1519 = vmatprep.subr.mxu0 0.0
  %1520 = vmatpush1.msra.mxu0 %v1351
  %1521 = vmatprep.subr.mxu0 0.0
  %1522 = vmatpush1.msra.mxu0 %v1352
  %1523 = vmatprep.subr.mxu0 0.0
  %1524 = vmatpush1.msra.mxu0 %v1353
  %1525 = vmatprep.subr.mxu0 0.0
  %1526 = vmatpush1.msra.mxu0 %v1354
  %1527 = vmatprep.subr.mxu0 0.0
  %1528 = vmatpush1.msra.mxu0 %v1355
  %1529 = vmatprep.subr.mxu0 0.0
  %1530 = vmatpush1.msra.mxu0 %v1356
  %1531 = vmatprep.subr.mxu0 0.0
  %1532 = vmatpush1.msra.mxu0 %v1357
  %1533 = vmatprep.subr.mxu0 0.0
  %1534 = vmatpush1.msra.mxu0 %v1358
  %1535 = vmatprep.subr.mxu0 0.0
  %1536 = vmatpush1.msra.mxu0 %v1359
  %1537 = vmatprep.subr.mxu0 0.0
  %1538 = vmatpush1.msra.mxu0 %v1360
  %1539 = vmatprep.subr.mxu0 0.0
  %1540 = vmatpush1.msra.mxu0 %v1361
  %1541 = vmatprep.subr.mxu0 0.0
  %1542 = vmatpush1.msra.mxu0 %v1362
  %1543 = vmatprep.subr.mxu0 0.0
  %1544 = vmatpush1.msra.mxu0 %v1363
  %1545 = vmatprep.subr.mxu0 0.0
  %1546 = vmatpush1.msra.mxu0 %v1364
  %1547 = vmatprep.subr.mxu0 0.0
  %1548 = vmatpush1.msra.mxu0 %v1365
  %1549 = vmatprep.subr.mxu0 0.0
  %1550 = vmatpush1.msra.mxu0 %v1366
  %1551 = vmatprep.subr.mxu0 0.0
  %1552 = vmatpush1.msra.mxu0 %v1367
  %1553 = vmatprep.subr.mxu0 0.0
  %1554 = vmatpush1.msra.mxu0 %v1368
  %1555 = vmatprep.subr.mxu0 0.0
  %1556 = vmatpush1.msra.mxu0 %v1369
  %1557 = vmatprep.subr.mxu0 0.0
  %1558 = vmatpush1.msra.mxu0 %v1370
  %1559 = vmatprep.subr.mxu0 0.0
  %1560 = vmatpush1.msra.mxu0 %v1371
  %1561 = vmatprep.subr.mxu0 0.0
  %1562 = vmatpush1.msra.mxu0 %v1372
  %1563 = vmatprep.subr.mxu0 0.0
  %1564 = vmatpush1.msra.mxu0 %v1373
  %1565 = vmatprep.subr.mxu0 0.0
  %1566 = vmatpush1.msra.mxu0 %v1374
  %1567 = vmatprep.subr.mxu0 0.0
  %1568 = vmatpush1.msra.mxu0 %v1375
  %1569 = vmatprep.subr.mxu0 0.0
  %1570 = vmatpush1.msra.mxu0 %v1376
  %1571 = vmatprep.subr.mxu0 0.0
  %1572 = vmatpush1.msra.mxu0 %v1377
  %1573 = vmatprep.subr.mxu0 0.0
  %1574 = vmatpush1.msra.mxu0 %v1378
  %1575 = vmatprep.subr.mxu0 0.0
  %1576 = vmatpush1.msra.mxu0 %v1379
  %1577 = vmatprep.mubr.f32.mxu0 %v34
  %1578 = vmatmul.mubr.f32.gmra.mrb[0].mxu0 %v33
  %v1579 = vpop.f32.mrb[0].mxu0
  %v1580 = vadd.f32 %v1387, %v1579
  %v1581 = vpop.f32.mrb[0].mxu0
  %1582 = vmatprep.mubr.f32.mxu0 %v37
  %1583 = vmatmul.mubr.f32.gmra.mrb[0].mxu0 %v36
  %v1584 = vpop.f32.mrb[0].mxu0
  %v1585 = vadd.f32 %v1392, %v1584
  %v1586 = vpop.f32.mrb[0].mxu0
  %1587 = vmatprep.mubr.f32.mxu0 %v40
  %1588 = vmatmul.mubr.f32.gmra.mrb[0].mxu0 %v39
  %v1589 = vpop.f32.mrb[0].mxu0
  %v1590 = vadd.f32 %v1397, %v1589
  %v1591 = vpop.f32.mrb[0].mxu0
  %1592 = vmatprep.mubr.f32.mxu0 %v43
  %1593 = vmatmul.mubr.f32.gmra.mrb[0].mxu0 %v42
  %v1594 = vpop.f32.mrb[0].mxu0
  %v1595 = vadd.f32 %v1402, %v1594
  %v1596 = vpop.f32.mrb[0].mxu0
  %1597 = vmatprep.mubr.f32.mxu0 %v46
  %1598 = vmatmul.mubr.f32.gmra.mrb[0].mxu0 %v45
  %v1599 = vpop.f32.mrb[0].mxu0
  %v1600 = vadd.f32 %v1407, %v1599
  %v1601 = vpop.f32.mrb[0].mxu0
  %1602 = vmatprep.mubr.f32.mxu0 %v49
  %1603 = vmatmul.mubr.f32.gmra.mrb[0].mxu0 %v48
  %v1604 = vpop.f32.mrb[0].mxu0
  %v1605 = vadd.f32 %v1412, %v1604
  %v1606 = vpop.f32.mrb[0].mxu0
  %1607 = vmatprep.mubr.f32.mxu0 %v52
  %1608 = vmatmul.mubr.f32.gmra.mrb[0].mxu0 %v51
  %v1609 = vpop.f32.mrb[0].mxu0
  %v1610 = vadd.f32 %v1417, %v1609
  %v1611 = vpop.f32.mrb[0].mxu0
  %1612 = vmatprep.mubr.f32.mxu0 %v55
  %1613 = vmatmul.mubr.f32.gmra.mrb[0].mxu0 %v54
  %v1614 = vpop.f32.mrb[0].mxu0
  %v1615 = vadd.f32 %v1422, %v1614
  %v1616 = vpop.f32.mrb[0].mxu0
  %1617 = vmatprep.mubr.f32.mxu0 %v58
  %1618 = vmatmul.mubr.f32.gmra.mrb[0].mxu0 %v57
  %v1619 = vpop.f32.mrb[0].mxu0
  %v1620 = vadd.f32 %v1427, %v1619
  %v1621 = vpop.f32.mrb[0].mxu0
  %1622 = vmatprep.mubr.f32.mxu0 %v61
  %1623 = vmatmul.mubr.f32.gmra.mrb[0].mxu0 %v60
  %v1624 = vpop.f32.mrb[0].mxu0
  %v1625 = vadd.f32 %v1432, %v1624
  %v1626 = vpop.f32.mrb[0].mxu0
  %1627 = vmatprep.mubr.f32.mxu0 %v64
  %1628 = vmatmul.mubr.f32.gmra.mrb[0].mxu0 %v63
  %v1629 = vpop.f32.mrb[0].mxu0
  %v1630 = vadd.f32 %v1437, %v1629
  %v1631 = vpop.f32.mrb[0].mxu0
  %1632 = vmatprep.mubr.f32.mxu0 %v67
  %1633 = vmatmul.mubr.f32.gmra.mrb[0].mxu0 %v66
  %v1634 = vpop.f32.mrb[0].mxu0
  %v1635 = vadd.f32 %v1442, %v1634
  %v1636 = vpop.f32.mrb[0].mxu0
  %1637 = vmatprep.mubr.f32.mxu0 %v70
  %1638 = vmatmul.mubr.f32.gmra.mrb[0].mxu0 %v69
  %v1639 = vpop.f32.mrb[0].mxu0
  %v1640 = vadd.f32 %v1447, %v1639
  %v1641 = vpop.f32.mrb[0].mxu0
  %1642 = vmatprep.mubr.f32.mxu0 %v73
  %1643 = vmatmul.mubr.f32.gmra.mrb[0].mxu0 %v72
  %v1644 = vpop.f32.mrb[0].mxu0
  %v1645 = vadd.f32 %v1452, %v1644
  %v1646 = vpop.f32.mrb[0].mxu0
  %1647 = vmatprep.mubr.f32.mxu0 %v76
  %1648 = vmatmul.mubr.f32.gmra.mrb[0].mxu0 %v75
  %v1649 = vpop.f32.mrb[0].mxu0
  %v1650 = vadd.f32 %v1457, %v1649
  %v1651 = vpop.f32.mrb[0].mxu0
  %1652 = vmatprep.mubr.f32.mxu0 %v79
  %1653 = vmatmul.mubr.f32.gmra.mrb[0].mxu0 %v78
  %v1654 = vpop.f32.mrb[0].mxu0
  %v1655 = vadd.f32 %v1462, %v1654
  %v1656 = vpop.f32.mrb[0].mxu0
  %1657 = vdwg.mxu0
  %1658 = vmatprep.subr.mxu0 0.0
  %1659 = vmatpush1.msra.mxu0 %v1380
  %1660 = vmatprep.subr.mxu0 0.0
  %1661 = vmatpush1.msra.mxu0 %v1381
  %1662 = vmatprep.subr.mxu0 0.0
  %1663 = vmatpush1.msra.mxu0 %v1382
  %1664 = vmatprep.subr.mxu0 0.0
  %1665 = vmatpush1.msra.mxu0 %v1383
  %1666 = vmatprep.subr.mxu0 0.0
  %1667 = vmatpush1.msra.mxu0 0.0
  %1668 = vmatprep.subr.mxu0 0.0
  %1669 = vmatpush1.msra.mxu0 0.0
  %1670 = vmatprep.subr.mxu0 0.0
  %1671 = vmatpush1.msra.mxu0 0.0
  %1672 = vmatprep.subr.mxu0 0.0
  %1673 = vmatpush1.msra.mxu0 0.0
  %1674 = vmatprep.subr.mxu0 0.0
  %1675 = vmatpush1.msra.mxu0 0.0
  %1676 = vmatprep.subr.mxu0 0.0
  %1677 = vmatpush1.msra.mxu0 0.0
  %1678 = vmatprep.subr.mxu0 0.0
  %1679 = vmatpush1.msra.mxu0 0.0
  %1680 = vmatprep.subr.mxu0 0.0
  %1681 = vmatpush1.msra.mxu0 0.0
  %1682 = vmatprep.subr.mxu0 0.0
  %1683 = vmatpush1.msra.mxu0 0.0
  %1684 = vmatprep.subr.mxu0 0.0
  %1685 = vmatpush1.msra.mxu0 0.0
  %1686 = vmatprep.subr.mxu0 0.0
  %1687 = vmatpush1.msra.mxu0 0.0
  %1688 = vmatprep.subr.mxu0 0.0
  %1689 = vmatpush1.msra.mxu0 0.0
  %1690 = vmatprep.subr.mxu0 0.0
  %1691 = vmatpush1.msra.mxu0 0.0
  %1692 = vmatprep.subr.mxu0 0.0
  %1693 = vmatpush1.msra.mxu0 0.0
  %1694 = vmatprep.subr.mxu0 0.0
  %1695 = vmatpush1.msra.mxu0 0.0
  %1696 = vmatprep.subr.mxu0 0.0
  %1697 = vmatpush1.msra.mxu0 0.0
  %1698 = vmatprep.subr.mxu0 0.0
  %1699 = vmatpush1.msra.mxu0 0.0
  %1700 = vmatprep.subr.mxu0 0.0
  %1701 = vmatpush1.msra.mxu0 0.0
  %1702 = vmatprep.subr.mxu0 0.0
  %1703 = vmatpush1.msra.mxu0 0.0
  %1704 = vmatprep.subr.mxu0 0.0
  %1705 = vmatpush1.msra.mxu0 0.0
  %1706 = vmatprep.subr.mxu0 0.0
  %1707 = vmatpush1.msra.mxu0 0.0
  %1708 = vmatprep.subr.mxu0 0.0
  %1709 = vmatpush1.msra.mxu0 0.0
  %1710 = vmatprep.subr.mxu0 0.0
  %1711 = vmatpush1.msra.mxu0 0.0
  %1712 = vmatprep.subr.mxu0 0.0
  %1713 = vmatpush1.msra.mxu0 0.0
  %1714 = vmatprep.subr.mxu0 0.0
  %1715 = vmatpush1.msra.mxu0 0.0
  %1716 = vmatprep.subr.mxu0 0.0
  %1717 = vmatpush1.msra.mxu0 0.0
  %1718 = vmatprep.subr.mxu0 0.0
  %1719 = vmatpush1.msra.mxu0 0.0
  %1720 = vmatprep.subr.mxu0 0.0
  %1721 = vmatpush1.msra.mxu0 0.0
  %1722 = vmatprep.mubr.f32.mxu0 0.0
  %1723 = vmatmul.mubr.f32.gmra.mrb[0].mxu0 %v1466
  %v1724 = vpop.f32.mrb[0].mxu0
  %v1725 = vadd.f32 %v1580, %v1724
  %v1726 = vpop.f32.mrb[0].mxu0
  %1727 = vmatprep.mubr.f32.mxu0 0.0
  %1728 = vmatmul.mubr.f32.gmra.mrb[0].mxu0 %v1469
  %v1729 = vpop.f32.mrb[0].mxu0
  %v1730 = vadd.f32 %v1585, %v1729
  %v1731 = vpop.f32.mrb[0].mxu0
  %1732 = vmatprep.mubr.f32.mxu0 0.0
  %1733 = vmatmul.mubr.f32.gmra.mrb[0].mxu0 %v1472
  %v1734 = vpop.f32.mrb[0].mxu0
  %v1735 = vadd.f32 %v1590, %v1734
  %v1736 = vpop.f32.mrb[0].mxu0
  %1737 = vmatprep.mubr.f32.mxu0 0.0
  %1738 = vmatmul.mubr.f32.gmra.mrb[0].mxu0 %v1475
  %v1739 = vpop.f32.mrb[0].mxu0
  %v1740 = vadd.f32 %v1595, %v1739
  %v1741 = vpop.f32.mrb[0].mxu0
  %1742 = vmatprep.mubr.f32.mxu0 0.0
  %1743 = vmatmul.mubr.f32.gmra.mrb[0].mxu0 %v1478
  %v1744 = vpop.f32.mrb[0].mxu0
  %v1745 = vadd.f32 %v1600, %v1744
  %v1746 = vpop.f32.mrb[0].mxu0
  %1747 = vmatprep.mubr.f32.mxu0 0.0
  %1748 = vmatmul.mubr.f32.gmra.mrb[0].mxu0 %v1481
  %v1749 = vpop.f32.mrb[0].mxu0
  %v1750 = vadd.f32 %v1605, %v1749
  %v1751 = vpop.f32.mrb[0].mxu0
  %1752 = vmatprep.mubr.f32.mxu0 0.0
  %1753 = vmatmul.mubr.f32.gmra.mrb[0].mxu0 %v1484
  %v1754 = vpop.f32.mrb[0].mxu0
  %v1755 = vadd.f32 %v1610, %v1754
  %v1756 = vpop.f32.mrb[0].mxu0
  %1757 = vmatprep.mubr.f32.mxu0 0.0
  %1758 = vmatmul.mubr.f32.gmra.mrb[0].mxu0 %v1487
  %v1759 = vpop.f32.mrb[0].mxu0
  %v1760 = vadd.f32 %v1615, %v1759
  %v1761 = vpop.f32.mrb[0].mxu0
  %1762 = vmatprep.mubr.f32.mxu0 0.0
  %1763 = vmatmul.mubr.f32.gmra.mrb[0].mxu0 %v1490
  %v1764 = vpop.f32.mrb[0].mxu0
  %v1765 = vadd.f32 %v1620, %v1764
  %v1766 = vpop.f32.mrb[0].mxu0
  %1767 = vmatprep.mubr.f32.mxu0 0.0
  %1768 = vmatmul.mubr.f32.gmra.mrb[0].mxu0 %v1493
  %v1769 = vpop.f32.mrb[0].mxu0
  %v1770 = vadd.f32 %v1625, %v1769
  %v1771 = vpop.f32.mrb[0].mxu0
  %1772 = vmatprep.mubr.f32.mxu0 0.0
  %1773 = vmatmul.mubr.f32.gmra.mrb[0].mxu0 %v1496
  %v1774 = vpop.f32.mrb[0].mxu0
  %v1775 = vadd.f32 %v1630, %v1774
  %v1776 = vpop.f32.mrb[0].mxu0
  %1777 = vmatprep.mubr.f32.mxu0 0.0
  %1778 = vmatmul.mubr.f32.gmra.mrb[0].mxu0 %v1499
  %v1779 = vpop.f32.mrb[0].mxu0
  %v1780 = vadd.f32 %v1635, %v1779
  %v1781 = vpop.f32.mrb[0].mxu0
  %1782 = vmatprep.mubr.f32.mxu0 0.0
  %1783 = vmatmul.mubr.f32.gmra.mrb[0].mxu0 %v1502
  %v1784 = vpop.f32.mrb[0].mxu0
  %v1785 = vadd.f32 %v1640, %v1784
  %v1786 = vpop.f32.mrb[0].mxu0
  %1787 = vmatprep.mubr.f32.mxu0 0.0
  %1788 = vmatmul.mubr.f32.gmra.mrb[0].mxu0 %v1505
  %v1789 = vpop.f32.mrb[0].mxu0
  %v1790 = vadd.f32 %v1645, %v1789
  %v1791 = vpop.f32.mrb[0].mxu0
  %1792 = vmatprep.mubr.f32.mxu0 0.0
  %1793 = vmatmul.mubr.f32.gmra.mrb[0].mxu0 %v1508
  %v1794 = vpop.f32.mrb[0].mxu0
  %v1795 = vadd.f32 %v1650, %v1794
  %v1796 = vpop.f32.mrb[0].mxu0
  %1797 = vmatprep.mubr.f32.mxu0 0.0
  %1798 = vmatmul.mubr.f32.gmra.mrb[0].mxu0 %v1511
  %v1799 = vpop.f32.mrb[0].mxu0
  %v1800 = vadd.f32 %v1655, %v1799
  %v1801 = vpop.f32.mrb[0].mxu0
  %1802 = vdwg.mxu0
  %v1803 = vmax.f32 %v1725, 0.0
  %v1804 = vmax.f32 %v1730, 0.0
  %v1805 = vmax.f32 %v1735, 0.0
  %v1806 = vmax.f32 %v1740, 0.0
  %v1807 = vmax.f32 %v1745, 0.0
  %v1808 = vmax.f32 %v1750, 0.0
  %v1809 = vmax.f32 %v1755, 0.0
  %v1810 = vmax.f32 %v1760, 0.0
  %v1811 = vmax.f32 %v1765, 0.0
  %v1812 = vmax.f32 %v1770, 0.0
  %v1813 = vmax.f32 %v1775, 0.0
  %v1814 = vmax.f32 %v1780, 0.0
  %v1815 = vmax.f32 %v1785, 0.0
  %v1816 = vmax.f32 %v1790, 0.0
  %v1817 = vmax.f32 %v1795, 0.0
  %v1818 = vmax.f32 %v1800, 0.0
  %1820 = vset.pattern.permute.xlu0 0
  %1821 = vperm.xlu0 %1820, %v108
  %v1822 = vpop.permute.xlu0 %1821
  %1825 = vset.pattern.permute.xlu0 0
  %1826 = vperm.xlu0 %1825, %v109
  %v1827 = vpop.permute.xlu0 %1826
  %1829 = vmatprep.subr.mxu0 0.0
  %1830 = vmatpush1.msra.mxu0 %v1803
  %1831 = vmatprep.subr.mxu0 0.0
  %1832 = vmatpush1.msra.mxu0 %v1804
  %1833 = vmatprep.subr.mxu0 0.0
  %1834 = vmatpush1.msra.mxu0 %v1805
  %1835 = vmatprep.subr.mxu0 0.0
  %1836 = vmatpush1.msra.mxu0 %v1806
  %1837 = vmatprep.subr.mxu0 0.0
  %1838 = vmatpush1.msra.mxu0 %v1807
  %1839 = vmatprep.subr.mxu0 0.0
  %1840 = vmatpush1.msra.mxu0 %v1808
  %1841 = vmatprep.subr.mxu0 0.0
  %1842 = vmatpush1.msra.mxu0 %v1809
  %1843 = vmatprep.subr.mxu0 0.0
  %1844 = vmatpush1.msra.mxu0 %v1810
  %1845 = vmatprep.subr.mxu0 0.0
  %1846 = vmatpush1.msra.mxu0 %v1811
  %1847 = vmatprep.subr.mxu0 0.0
  %1848 = vmatpush1.msra.mxu0 %v1812
  %1849 = vmatprep.subr.mxu0 0.0
  %1850 = vmatpush1.msra.mxu0 %v1813
  %1851 = vmatprep.subr.mxu0 0.0
  %1852 = vmatpush1.msra.mxu0 %v1814
  %1853 = vmatprep.subr.mxu0 0.0
  %1854 = vmatpush1.msra.mxu0 %v1815
  %1855 = vmatprep.subr.mxu0 0.0
  %1856 = vmatpush1.msra.mxu0 %v1816
  %1857 = vmatprep.subr.mxu0 0.0
  %1858 = vmatpush1.msra.mxu0 %v1817
  %1859 = vmatprep.subr.mxu0 0.0
  %1860 = vmatpush1.msra.mxu0 %v1818
  %1861 = vmatprep.subr.mxu0 0.0
  %1862 = vmatpush1.msra.mxu0 0.0
  %1863 = vmatprep.subr.mxu0 0.0
  %1864 = vmatpush1.msra.mxu0 0.0
  %1865 = vmatprep.subr.mxu0 0.0
  %1866 = vmatpush1.msra.mxu0 0.0
  %1867 = vmatprep.subr.mxu0 0.0
  %1868 = vmatpush1.msra.mxu0 0.0
  %1869 = vmatprep.subr.mxu0 0.0
  %1870 = vmatpush1.msra.mxu0 0.0
  %1871 = vmatprep.subr.mxu0 0.0
  %1872 = vmatpush1.msra.mxu0 0.0
  %1873 = vmatprep.subr.mxu0 0.0
  %1874 = vmatpush1.msra.mxu0 0.0
  %1875 = vmatprep.subr.mxu0 0.0
  %1876 = vmatpush1.msra.mxu0 0.0
  %1877 = vmatprep.subr.mxu0 0.0
  %1878 = vmatpush1.msra.mxu0 0.0
  %1879 = vmatprep.subr.mxu0 0.0
  %1880 = vmatpush1.msra.mxu0 0.0
  %1881 = vmatprep.subr.mxu0 0.0
  %1882 = vmatpush1.msra.mxu0 0.0
  %1883 = vmatprep.subr.mxu0 0.0
  %1884 = vmatpush1.msra.mxu0 0.0
  %1885 = vmatprep.subr.mxu0 0.0
  %1886 = vmatpush1.msra.mxu0 0.0
  %1887 = vmatprep.subr.mxu0 0.0
  %1888 = vmatpush1.msra.mxu0 0.0
  %1889 = vmatprep.subr.mxu0 0.0
  %1890 = vmatpush1.msra.mxu0 0.0
  %1891 = vmatprep.subr.mxu0 0.0
  %1892 = vmatpush1.msra.mxu0 0.0
  %1893 = vmatprep.mubr.f32.mxu0 0.0
  %1894 = vmatmul.mubr.f32.gmra.mrb[0].mxu0 %v31
  %v1895 = vpop.f32.mrb[0].mxu0
  %v1896 = vadd.f32 %v1822, %v1895
  %v1897 = vpop.f32.mrb[0].mxu0
  %1898 = vmatprep.mubr.f32.mxu0 0.0
  %1899 = vmatmul.mubr.f32.gmra.mrb[0].mxu0 %v32
  %v1900 = vpop.f32.mrb[0].mxu0
  %v1901 = vadd.f32 %v1827, %v1900
  %v1902 = vpop.f32.mrb[0].mxu0
  %1903 = vdwg.mxu0
  %v1904 = vmul.f32 %v1901, 1.442695
  %v1905 = vpow.pop %v1904
  %v1906 = vld [vmem:[%s4] sm:$0xff]
  %v1907 = vmul.f32 %v1905, %v1906
  %v1908 = vadd.f32 %v1896, %v1907
  %v1909 = vmul.f32 %v1905, %v1905
  %v1910 = vmul.f32 %v1896, %v1896
  %v1911 = vadd.f32 %v1909, %v1910
  %v1912 = vsub.f32 %v1911, %v1901
  %v1913 = vsub.f32 %v1912, 0.5
  %vm1914 = vcmask 15360
  %v1915 = vsel %vm1914, %v1913, 0.0
  %1916 = vadd.xlane.f32.xlu0 %v1915
  %v1917 = vpop.xlane.xlu0 %1916
  %v1918 = vrot.slane %v1917, 4
  %v1919 = vadd.f32 %v1917, %v1918
  %v1920 = vrot.slane %v1919, 2
  %v1921 = vadd.f32 %v1919, %v1920
  %v1922 = vrot.slane %v1921, 1
  %v1923 = vadd.f32 %v1921, %v1922
  %1924 = vst.msk [vmem:[%s5] sm:$0xff] %vm1914, %v1908
  %vm1925 = vcmask 8192
  %1926 = vst.msk [vmem:[%s5 + $0x8] sm:$0x1] %vm1925, %v1923
  // Predicated region
  $region22: #{variational_encoder_forward.1} parent=0 // pred_check
    _
  $region23: #{variational_encoder_forward.1} parent=0 // pred_check_branch
    %1928 = sbr.rel (0) target = $region25
  $region24: #{variational_encoder_forward.1} parent=0 // pred_region
    _
  $region25: #{variational_encoder_forward.1} parent=0 // pred_fallthru
    _
  // Predicated region
  $region26: #{variational_encoder_forward.1} parent=0 // pred_check
    _
  $region27: #{variational_encoder_forward.1} parent=0 // pred_check_branch
    %1930 = sbr.rel (0) target = $region29
  $region28: #{variational_encoder_forward.1} parent=0 // pred_region
    _
  $region29: #{variational_encoder_forward.1} parent=0 // pred_fallthru
    _

</llo_original>
